<compile_context>
chip_gen: v5e
topology: v5e:2x2
jax: 0.10.0
libtpu: 0.0.40
codegen_flags: <defaults>
</compile_context>

<pallas_src>
import functools
import math

import numpy as np
import jax
import jax.numpy as jnp
from jax.experimental import pallas as pl
from jax.experimental.pallas import tpu as pltpu


# ----------------------------------------------------------------------------
# Pallas kernel: one grid step handles one batch element n and all K classes.
# ----------------------------------------------------------------------------
def _soft_ncuts_kernel(labels_ref, inputs_ref, thbig_ref, aux_ref, out_ref,
                       sbuf_ref, *, use_kron, K, C, H, W, D, radius,
                       spatial_sigma, inv_intensity_sigma2):
    WD = W * D
    inv_hwd = 1.0 / float(H * W * D)

    # --- Phase 1: per-class intensity weights, staged sublane-stacked --------
    # Each class writes its two conv operands (cp*w, w) directly as bf16 rows
    # into the shared VMEM scratch (rows [2k*H, (2k+2)*H)).  No concatenate
    # copies, nothing from this phase (besides the scratch) stays live.
    # Class-mean sums are kept as small VPU reductions: at K=C=2 an MXU
    # (C,HWD)@(HWD,K) formulation would need a lane<->sublane relayout of both
    # blocks that costs more than the K*C reductions it replaces.
    for k in range(K):
        cp = labels_ref[0, k]                              # (H, WD) f32
        denom_mean = jnp.sum(cp) * inv_hwd + 1e-5
        diff = jnp.zeros((H, WD), jnp.float32)
        for c in range(C):
            xc = inputs_ref[0, c]                          # (H, WD) f32
            class_mean_c = (jnp.sum(xc * cp) * inv_hwd) / denom_mean
            d = xc - class_mean_c
            diff = diff + d * d
        w = jnp.exp(-(diff * diff) * inv_intensity_sigma2)
        sbuf_ref[2 * k * H:(2 * k + 1) * H, :] = (cp * w).astype(jnp.bfloat16)
        sbuf_ref[(2 * k + 1) * H:(2 * k + 2) * H, :] = w.astype(jnp.bfloat16)

    s = sbuf_ref[...]                                      # (2K*H, WD) bf16

    # --- Phase 2: conv over the (W, D) plane ----------------------------------
    if use_kron:
        # Dense kron(T_w, T_d), contraction = WD.  Only used when WD is small
        # enough for the operator to stay cheap & resident.
        conv_wd = jnp.dot(s, aux_ref[...], preferred_element_type=jnp.float32)
    else:
        # Banded separable conv: zero-filled lane shifts + masked accumulation.
        # Removes the O(WD^2) FLOPs/VMEM of the kron without any in-kernel
        # (., W, D) <-> (., D, W) relayout.
        d_idx = aux_ref[...]                               # (1, WD) int32 = lane % D
        sf = s.astype(jnp.float32)
        sig2 = 2.0 * float(spatial_sigma) ** 2

        def shift_right(x, n):       # out[:, l] = x[:, l - n], zero-filled
            pad = jnp.zeros((x.shape[0], n), x.dtype)
            return jnp.concatenate([pad, x[:, :x.shape[1] - n]], axis=1)

        def shift_left(x, n):        # out[:, l] = x[:, l + n], zero-filled
            pad = jnp.zeros((x.shape[0], n), x.dtype)
            return jnp.concatenate([x[:, n:], pad], axis=1)

        # conv along D: mask keeps each shift inside its own length-D block.
        acc_d = sf
        for dz in range(1, min(radius, D - 1) + 1):
            g = math.exp(-(dz * dz) / sig2)
            acc_d = acc_d + g * jnp.where(d_idx >= dz, shift_right(sf, dz), 0.0)
            acc_d = acc_d + g * jnp.where(d_idx < D - dz, shift_left(sf, dz), 0.0)
        # conv along W: shifts are whole D-blocks; row-end zero fill IS the
        # W boundary, so no mask is needed.
        conv_wd = acc_d
        for dw in range(1, min(radius, W - 1) + 1):
            g = math.exp(-(dw * dw) / sig2)
            conv_wd = conv_wd + g * shift_right(acc_d, dw * D)
            conv_wd = conv_wd + g * shift_left(acc_d, dw * D)

    # --- Phase 3: conv along H, one block-diagonal MXU matmul -----------------
    # kron(I_{2K}, T_h) raises contraction depth from H to 2K*H and keeps the
    # operands in the sublane-stacked layout (no relayout between conv stages).
    conv_hwd = jnp.dot(thbig_ref[...], conv_wd.astype(jnp.bfloat16),
                       preferred_element_type=jnp.float32)   # (2K*H, WD) f32

    # --- Phase 4: per-class numerator / denominator / ratio -------------------
    ratios = []
    for k in range(K):
        cp = labels_ref[0, k]        # re-read from VMEM ref: keeps no planes live
        num = jnp.sum(cp * conv_hwd[2 * k * H:(2 * k + 1) * H])
        den = jnp.sum(cp * conv_hwd[(2 * k + 1) * H:(2 * k + 2) * H])
        ratios.append(num / (den + 1e-6))
    # NOTE: K (<128) lanes => a tiny masked store per step; kept in VMEM since
    # its absolute cost is negligible and it is the proven-safe path.
    out_ref[...] = jnp.stack(ratios).reshape(1, 1, K)


# ----------------------------------------------------------------------------
# Wrapper: Gaussian operator setup + pallas_call + final reduction.
# ----------------------------------------------------------------------------
def _banded_gaussian(length, radius, sigma):
    idx = np.arange(length)
    delta = idx[:, None] - idx[None, :]
    g = np.exp(-(delta.astype(np.float64) ** 2) / (2.0 * float(sigma) ** 2))
    return np.where(np.abs(delta) <= radius, g, 0.0).astype(np.float32)


def soft_ncuts_loss(labels, inputs, intensity_sigma, spatial_sigma,
                    radius=None, kron_lane_limit=1024):
    N, K, H, W, D = labels.shape
    C = inputs.shape[1]
    if radius is None:
        radius = min(max(5, math.ceil(min(H, W, D) / 20)), H, W, D)
    radius = int(radius)
    WD = W * D
    use_kron = WD <= kron_lane_limit      # dense kron only for small W*D planes

    # H-axis operator: block-diagonal kron(I_{2K}, T_h), bf16.
    t_h = _banded_gaussian(H, radius, spatial_sigma)
    thbig = jnp.asarray(np.kron(np.eye(2 * K, dtype=np.float32), t_h),
                        dtype=jnp.bfloat16)                    # (2K*H, 2K*H)

    if use_kron:
        t_wd = np.kron(_banded_gaussian(W, radius, spatial_sigma),
                       _banded_gaussian(D, radius, spatial_sigma))
        aux = jnp.asarray(t_wd, dtype=jnp.bfloat16)            # (WD, WD)
        aux_spec = pl.BlockSpec((WD, WD), lambda n: (0, 0))
        aux_bytes = 2 * WD * WD * 2
    else:
        d_idx = np.tile(np.arange(D, dtype=np.int32), W)[None, :]   # (1, WD)
        aux = jnp.asarray(d_idx)
        aux_spec = pl.BlockSpec((1, WD), lambda n: (0, 0))
        aux_bytes = 2 * 8 * WD * 4

    # Lane-dense flattening: (H, W*D) so the last (lane) axis is >= 128 wide.
    labels2 = labels.reshape(N, K, H, WD).astype(jnp.float32)
    inputs2 = inputs.reshape(N, C, H, WD).astype(jnp.float32)

    kernel = functools.partial(
        _soft_ncuts_kernel, use_kron=use_kron, K=K, C=C, H=H, W=W, D=D,
        radius=radius, spatial_sigma=float(spatial_sigma),
        inv_intensity_sigma2=1.0 / float(intensity_sigma) ** 2)

    # VMEM budget from the real footprint (double-buffered input blocks, the
    # resident operators, the bf16 operand scratch and f32 conv intermediates),
    # floored at the 32 MiB scoped default and capped at 48 MiB so v7x's 64 MiB
    # physical VMEM keeps headroom for Mosaic internals.
    op_elems = 2 * K * H * WD
    block_bytes = (
        2 * K * H * WD * 4                 # labels block, double buffered
        + 2 * C * H * WD * 4               # inputs block, double buffered
        + 2 * (2 * K * H) ** 2 * 2         # block-diag T_h (bf16)
        + aux_bytes                        # kron(T_w,T_d) or d-index row
        + op_elems * 2                     # bf16 operand staging scratch
        + 4 * op_elems * 4                 # f32 conv intermediates / shift temps
        + 6 * H * WD * 4                   # weight-phase temporaries
    )
    vmem_limit = int(min(48 * 1024 * 1024,
                         max(32 * 1024 * 1024, 2 * block_bytes)))

    # grid=(N,) parallel: each batch element independent (keeps both v7x
    # TensorCores busy for N>=2).  For N==1 the K classes could become a second
    # parallel grid axis, but that would halve the H-conv contraction depth the
    # block-diagonal T_h raises, so it is intentionally not done here.
    ratios = pl.pallas_call(
        kernel,
        out_shape=jax.ShapeDtypeStruct((N, 1, K), jnp.float32),
        grid=(N,),
        in_specs=[
            pl.BlockSpec((1, K, H, WD), lambda n: (n, 0, 0, 0)),
            pl.BlockSpec((1, C, H, WD), lambda n: (n, 0, 0, 0)),
            # Constant index maps: DMA'd once, resident across the whole grid.
            pl.BlockSpec((2 * K * H, 2 * K * H), lambda n: (0, 0)),
            aux_spec,
        ],
        out_specs=pl.BlockSpec((1, 1, K), lambda n: (n, 0, 0)),
        scratch_shapes=[pltpu.VMEM((2 * K * H, WD), jnp.bfloat16)],
        compiler_params=pltpu.CompilerParams(
            dimension_semantics=("parallel",),
            vmem_limit_bytes=vmem_limit),
    )(labels2, inputs2, thbig, aux)

    ratios = ratios.reshape(N, K)
    # L1Loss(ratio, 0) with 'mean' reduction over batch, summed over K classes.
    loss = jnp.sum(jnp.mean(jnp.abs(ratios), axis=0))
    return jnp.float32(K) - loss


# ----------------------------------------------------------------------------
# Pure-JAX reference (direct 3D conv) for a sanity check.
# ----------------------------------------------------------------------------
def ref_soft_ncuts_loss(labels, inputs, intensity_sigma, spatial_sigma, radius):
    N, K, H, W, D = labels.shape
    r = radius
    coords = jnp.arange(-r, r + 1, dtype=jnp.float32)
    d2 = (coords[:, None, None] ** 2 + coords[None, :, None] ** 2
          + coords[None, None, :] ** 2)
    kern = jnp.exp(-d2 / (2.0 * spatial_sigma ** 2))[None, None]  # (1,1,ks,ks,ks)

    def conv(v):
        return jax.lax.conv_general_dilated(
            v, kern, (1, 1, 1), [(r, r)] * 3,
            dimension_numbers=("NCDHW", "OIDHW", "NCDHW"))

    loss = 0.0
    for k in range(K):
        cp = labels[:, k:k + 1]
        cmean = (jnp.mean(inputs * cp, axis=(2, 3, 4), keepdims=True)
                 / (jnp.mean(cp, axis=(2, 3, 4), keepdims=True) + 1e-5))
        diff = jnp.sum((inputs - cmean) ** 2, axis=1, keepdims=True)
        w = jnp.exp(-(diff ** 2) / intensity_sigma ** 2)
        num = jnp.sum(cp * conv(cp * w), axis=(1, 2, 3, 4))
        den = jnp.sum(cp * conv(w), axis=(1, 2, 3, 4))
        loss = loss + jnp.mean(jnp.abs(num / (den + 1e-6)))
    return jnp.float32(K) - loss


if __name__ == "__main__":
    N, K, C, H, W, D = 2, 2, 2, 16, 16, 16
    intensity_sigma, spatial_sigma = 2.0, 4.0
    radius = min(max(5, math.ceil(min(H, W, D) / 20)), H, W, D)  # -> 5

    key = jax.random.PRNGKey(0)
    k1, k2 = jax.random.split(key)
    logits = jax.random.normal(k1, (N, K, H, W, D), dtype=jnp.float32)
    labels = jax.nn.softmax(logits, axis=1)            # class probabilities
    inputs = jax.random.normal(k2, (N, C, H, W, D), dtype=jnp.float32)

    # Small-plane (kron) path.
    out_kron = jax.block_until_ready(
        soft_ncuts_loss(labels, inputs, intensity_sigma, spatial_sigma, radius))
    # Large-volume (separable, no-kron) path, forced at the same shape.
    out_sep = jax.block_until_ready(
        soft_ncuts_loss(labels, inputs, intensity_sigma, spatial_sigma, radius,
                        kron_lane_limit=0))

    ref = jax.block_until_ready(
        ref_soft_ncuts_loss(labels, inputs, intensity_sigma, spatial_sigma,
                            radius))

    assert bool(jnp.isfinite(out_kron)) and bool(jnp.isfinite(out_sep))
    np.testing.assert_allclose(np.asarray(out_kron), np.asarray(ref),
                               rtol=5e-2, atol=5e-2)
    np.testing.assert_allclose(np.asarray(out_sep), np.asarray(ref),
                               rtol=5e-2, atol=5e-2)
    print("KERNEL_OK")
</pallas_src>

<mosaic_0001>
module attributes {stable_mosaic.version = 11 : i64} {
  func.func @_soft_ncuts_kernel(%arg0: i32, %arg1: memref<1x2x16x256xf32, #tpu.memory_space<vmem>>, %arg2: memref<1x2x16x256xf32, #tpu.memory_space<vmem>>, %arg3: memref<64x64xbf16, #tpu.memory_space<vmem>>, %arg4: memref<256x256xbf16, #tpu.memory_space<vmem>>, %arg5: memref<1x1x2xf32, #tpu.memory_space<vmem>>, %arg6: memref<64x256xbf16, #tpu.memory_space<vmem>>) attributes {dimension_semantics = [#tpu.dimension_semantics<parallel>], iteration_bounds = array<i64: 2>, scalar_prefetch = 0 : i64, scratch_operands = 1 : i64, tpu.core_type = #tpu.core_type<tc>, window_params = [{transform_indices = @transform_0, window_bounds = array<i64: 1, 2, 16, 256>}, {transform_indices = @transform_1, window_bounds = array<i64: 1, 2, 16, 256>}, {pipeline_mode = #tpu.pipeline_mode<synchronous>, transform_indices = @transform_2, window_bounds = array<i64: 64, 64>}, {pipeline_mode = #tpu.pipeline_mode<synchronous>, transform_indices = @transform_3, window_bounds = array<i64: 256, 256>}, {transform_indices = @transform_4, window_bounds = array<i64: 1, 1, 2>}]} {
    %c0 = arith.constant 0 : index
    %c0_0 = arith.constant 0 : index
    %c0_1 = arith.constant 0 : index
    %c0_2 = arith.constant 0 : index
    %0 = vector.load %arg1[%c0, %c0_0, %c0_1, %c0_2] : memref<1x2x16x256xf32, #tpu.memory_space<vmem>>, vector<1x1x16x256xf32>
    %1 = vector.shape_cast %0 : vector<1x1x16x256xf32> to vector<16x256xf32>
    %2 = vector.shape_cast %1 : vector<16x256xf32> to vector<1x16x256xf32>
    %cst = arith.constant dense<0.000000e+00> : vector<1xf32>
    %3 = vector.multi_reduction <add>, %2, %cst [1, 2] : vector<1x16x256xf32> to vector<1xf32>
    %4 = vector.shape_cast %3 : vector<1xf32> to vector<1x1x1xf32>
    %5 = vector.extract %4[0, 0, 0] : f32 from vector<1x1x1xf32>
    %cst_3 = arith.constant 2.44140625E-4 : f32
    %6 = arith.mulf %5, %cst_3 : f32
    %cst_4 = arith.constant 9.99999974E-6 : f32
    %7 = arith.addf %6, %cst_4 : f32
    %cst_5 = arith.constant 0.000000e+00 : f32
    %8 = vector.broadcast %cst_5 : f32 to vector<16x256xf32>
    %c0_6 = arith.constant 0 : index
    %c0_7 = arith.constant 0 : index
    %c0_8 = arith.constant 0 : index
    %c0_9 = arith.constant 0 : index
    %9 = vector.load %arg2[%c0_6, %c0_7, %c0_8, %c0_9] : memref<1x2x16x256xf32, #tpu.memory_space<vmem>>, vector<1x1x16x256xf32>
    %10 = vector.shape_cast %9 : vector<1x1x16x256xf32> to vector<16x256xf32>
    %11 = arith.mulf %10, %1 : vector<16x256xf32>
    %12 = vector.shape_cast %11 : vector<16x256xf32> to vector<1x16x256xf32>
    %cst_10 = arith.constant dense<0.000000e+00> : vector<1xf32>
    %13 = vector.multi_reduction <add>, %12, %cst_10 [1, 2] : vector<1x16x256xf32> to vector<1xf32>
    %14 = vector.shape_cast %13 : vector<1xf32> to vector<1x1x1xf32>
    %15 = vector.extract %14[0, 0, 0] : f32 from vector<1x1x1xf32>
    %cst_11 = arith.constant 2.44140625E-4 : f32
    %16 = arith.mulf %15, %cst_11 : f32
    %17 = arith.divf %16, %7 : f32
    %18 = vector.broadcast %17 : f32 to vector<16x256xf32>
    %19 = arith.subf %10, %18 : vector<16x256xf32>
    %20 = arith.mulf %19, %19 : vector<16x256xf32>
    %21 = arith.addf %8, %20 : vector<16x256xf32>
    %c0_12 = arith.constant 0 : index
    %c1 = arith.constant 1 : index
    %c0_13 = arith.constant 0 : index
    %c0_14 = arith.constant 0 : index
    %22 = vector.load %arg2[%c0_12, %c1, %c0_13, %c0_14] : memref<1x2x16x256xf32, #tpu.memory_space<vmem>>, vector<1x1x16x256xf32>
    %23 = vector.shape_cast %22 : vector<1x1x16x256xf32> to vector<16x256xf32>
    %24 = arith.mulf %23, %1 : vector<16x256xf32>
    %25 = vector.shape_cast %24 : vector<16x256xf32> to vector<1x16x256xf32>
    %cst_15 = arith.constant dense<0.000000e+00> : vector<1xf32>
    %26 = vector.multi_reduction <add>, %25, %cst_15 [1, 2] : vector<1x16x256xf32> to vector<1xf32>
    %27 = vector.shape_cast %26 : vector<1xf32> to vector<1x1x1xf32>
    %28 = vector.extract %27[0, 0, 0] : f32 from vector<1x1x1xf32>
    %cst_16 = arith.constant 2.44140625E-4 : f32
    %29 = arith.mulf %28, %cst_16 : f32
    %30 = arith.divf %29, %7 : f32
    %31 = vector.broadcast %30 : f32 to vector<16x256xf32>
    %32 = arith.subf %23, %31 : vector<16x256xf32>
    %33 = arith.mulf %32, %32 : vector<16x256xf32>
    %34 = arith.addf %21, %33 : vector<16x256xf32>
    %35 = arith.mulf %34, %34 : vector<16x256xf32>
    %cst_17 = arith.constant 0.000000e+00 : f32
    %36 = vector.broadcast %cst_17 : f32 to vector<16x256xf32>
    %37 = arith.subf %36, %35 : vector<16x256xf32>
    %cst_18 = arith.constant 2.500000e-01 : f32
    %38 = vector.broadcast %cst_18 : f32 to vector<16x256xf32>
    %39 = arith.mulf %37, %38 : vector<16x256xf32>
    %40 = math.exp %39 : vector<16x256xf32>
    %41 = arith.mulf %1, %40 : vector<16x256xf32>
    %42 = arith.truncf %41 : vector<16x256xf32> to vector<16x256xbf16>
    %c0_19 = arith.constant 0 : index
    %c0_20 = arith.constant 0 : index
    %43 = vector.load %arg6[%c0_19, %c0_20] : memref<64x256xbf16, #tpu.memory_space<vmem>>, vector<16x256xbf16>
    tpu.vector_store %arg6[%c0_19, %c0_20], %42 {strides = array<i32>} : memref<64x256xbf16, #tpu.memory_space<vmem>>, vector<16x256xbf16>,
    %44 = arith.truncf %40 : vector<16x256xf32> to vector<16x256xbf16>
    %c16 = arith.constant 16 : index
    %c0_21 = arith.constant 0 : index
    %45 = vector.load %arg6[%c16, %c0_21] : memref<64x256xbf16, #tpu.memory_space<vmem>>, vector<16x256xbf16>
    tpu.vector_store %arg6[%c16, %c0_21], %44 {strides = array<i32>} : memref<64x256xbf16, #tpu.memory_space<vmem>>, vector<16x256xbf16>,
    %c0_22 = arith.constant 0 : index
    %c1_23 = arith.constant 1 : index
    %c0_24 = arith.constant 0 : index
    %c0_25 = arith.constant 0 : index
    %46 = vector.load %arg1[%c0_22, %c1_23, %c0_24, %c0_25] : memref<1x2x16x256xf32, #tpu.memory_space<vmem>>, vector<1x1x16x256xf32>
    %47 = vector.shape_cast %46 : vector<1x1x16x256xf32> to vector<16x256xf32>
    %48 = vector.shape_cast %47 : vector<16x256xf32> to vector<1x16x256xf32>
    %cst_26 = arith.constant dense<0.000000e+00> : vector<1xf32>
    %49 = vector.multi_reduction <add>, %48, %cst_26 [1, 2] : vector<1x16x256xf32> to vector<1xf32>
    %50 = vector.shape_cast %49 : vector<1xf32> to vector<1x1x1xf32>
    %51 = vector.extract %50[0, 0, 0] : f32 from vector<1x1x1xf32>
    %cst_27 = arith.constant 2.44140625E-4 : f32
    %52 = arith.mulf %51, %cst_27 : f32
    %cst_28 = arith.constant 9.99999974E-6 : f32
    %53 = arith.addf %52, %cst_28 : f32
    %cst_29 = arith.constant 0.000000e+00 : f32
    %54 = vector.broadcast %cst_29 : f32 to vector<16x256xf32>
    %c0_30 = arith.constant 0 : index
    %c0_31 = arith.constant 0 : index
    %c0_32 = arith.constant 0 : index
    %c0_33 = arith.constant 0 : index
    %55 = vector.load %arg2[%c0_30, %c0_31, %c0_32, %c0_33] : memref<1x2x16x256xf32, #tpu.memory_space<vmem>>, vector<1x1x16x256xf32>
    %56 = vector.shape_cast %55 : vector<1x1x16x256xf32> to vector<16x256xf32>
    %57 = arith.mulf %56, %47 : vector<16x256xf32>
    %58 = vector.shape_cast %57 : vector<16x256xf32> to vector<1x16x256xf32>
    %cst_34 = arith.constant dense<0.000000e+00> : vector<1xf32>
    %59 = vector.multi_reduction <add>, %58, %cst_34 [1, 2] : vector<1x16x256xf32> to vector<1xf32>
    %60 = vector.shape_cast %59 : vector<1xf32> to vector<1x1x1xf32>
    %61 = vector.extract %60[0, 0, 0] : f32 from vector<1x1x1xf32>
    %cst_35 = arith.constant 2.44140625E-4 : f32
    %62 = arith.mulf %61, %cst_35 : f32
    %63 = arith.divf %62, %53 : f32
    %64 = vector.broadcast %63 : f32 to vector<16x256xf32>
    %65 = arith.subf %56, %64 : vector<16x256xf32>
    %66 = arith.mulf %65, %65 : vector<16x256xf32>
    %67 = arith.addf %54, %66 : vector<16x256xf32>
    %c0_36 = arith.constant 0 : index
    %c1_37 = arith.constant 1 : index
    %c0_38 = arith.constant 0 : index
    %c0_39 = arith.constant 0 : index
    %68 = vector.load %arg2[%c0_36, %c1_37, %c0_38, %c0_39] : memref<1x2x16x256xf32, #tpu.memory_space<vmem>>, vector<1x1x16x256xf32>
    %69 = vector.shape_cast %68 : vector<1x1x16x256xf32> to vector<16x256xf32>
    %70 = arith.mulf %69, %47 : vector<16x256xf32>
    %71 = vector.shape_cast %70 : vector<16x256xf32> to vector<1x16x256xf32>
    %cst_40 = arith.constant dense<0.000000e+00> : vector<1xf32>
    %72 = vector.multi_reduction <add>, %71, %cst_40 [1, 2] : vector<1x16x256xf32> to vector<1xf32>
    %73 = vector.shape_cast %72 : vector<1xf32> to vector<1x1x1xf32>
    %74 = vector.extract %73[0, 0, 0] : f32 from vector<1x1x1xf32>
    %cst_41 = arith.constant 2.44140625E-4 : f32
    %75 = arith.mulf %74, %cst_41 : f32
    %76 = arith.divf %75, %53 : f32
    %77 = vector.broadcast %76 : f32 to vector<16x256xf32>
    %78 = arith.subf %69, %77 : vector<16x256xf32>
    %79 = arith.mulf %78, %78 : vector<16x256xf32>
    %80 = arith.addf %67, %79 : vector<16x256xf32>
    %81 = arith.mulf %80, %80 : vector<16x256xf32>
    %cst_42 = arith.constant 0.000000e+00 : f32
    %82 = vector.broadcast %cst_42 : f32 to vector<16x256xf32>
    %83 = arith.subf %82, %81 : vector<16x256xf32>
    %cst_43 = arith.constant 2.500000e-01 : f32
    %84 = vector.broadcast %cst_43 : f32 to vector<16x256xf32>
    %85 = arith.mulf %83, %84 : vector<16x256xf32>
    %86 = math.exp %85 : vector<16x256xf32>
    %87 = arith.mulf %47, %86 : vector<16x256xf32>
    %88 = arith.truncf %87 : vector<16x256xf32> to vector<16x256xbf16>
    %c32 = arith.constant 32 : index
    %c0_44 = arith.constant 0 : index
    %89 = vector.load %arg6[%c32, %c0_44] : memref<64x256xbf16, #tpu.memory_space<vmem>>, vector<16x256xbf16>
    tpu.vector_store %arg6[%c32, %c0_44], %88 {strides = array<i32>} : memref<64x256xbf16, #tpu.memory_space<vmem>>, vector<16x256xbf16>,
    %90 = arith.truncf %86 : vector<16x256xf32> to vector<16x256xbf16>
    %c48 = arith.constant 48 : index
    %c0_45 = arith.constant 0 : index
    %91 = vector.load %arg6[%c48, %c0_45] : memref<64x256xbf16, #tpu.memory_space<vmem>>, vector<16x256xbf16>
    tpu.vector_store %arg6[%c48, %c0_45], %90 {strides = array<i32>} : memref<64x256xbf16, #tpu.memory_space<vmem>>, vector<16x256xbf16>,
    %c0_46 = arith.constant 0 : index
    %c0_47 = arith.constant 0 : index
    %92 = vector.load %arg6[%c0_46, %c0_47] : memref<64x256xbf16, #tpu.memory_space<vmem>>, vector<64x256xbf16>
    %c0_48 = arith.constant 0 : index
    %c0_49 = arith.constant 0 : index
    %93 = vector.load %arg4[%c0_48, %c0_49] : memref<256x256xbf16, #tpu.memory_space<vmem>>, vector<256x256xbf16>
    %cst_50 = arith.constant dense<0.000000e+00> : vector<64x256xf32>
    %94 = tpu.matmul %92, %93, %cst_50 {dimension_numbers = #tpu.dot_dimension_numbers<[1], [0], [0], [1], [0, 0, 1, 1], [], []>} : vector<64x256xbf16>, vector<256x256xbf16>, vector<64x256xf32> -> vector<64x256xf32>
    %c0_51 = arith.constant 0 : index
    %c0_52 = arith.constant 0 : index
    %95 = vector.load %arg3[%c0_51, %c0_52] : memref<64x64xbf16, #tpu.memory_space<vmem>>, vector<64x64xbf16>
    %96 = arith.truncf %94 : vector<64x256xf32> to vector<64x256xbf16>
    %cst_53 = arith.constant dense<0.000000e+00> : vector<64x256xf32>
    %97 = tpu.matmul %95, %96, %cst_53 {dimension_numbers = #tpu.dot_dimension_numbers<[1], [0], [0], [1], [0, 0, 1, 1], [], []>} : vector<64x64xbf16>, vector<64x256xbf16>, vector<64x256xf32> -> vector<64x256xf32>
    %c0_54 = arith.constant 0 : index
    %c0_55 = arith.constant 0 : index
    %c0_56 = arith.constant 0 : index
    %c0_57 = arith.constant 0 : index
    %98 = vector.load %arg1[%c0_54, %c0_55, %c0_56, %c0_57] : memref<1x2x16x256xf32, #tpu.memory_space<vmem>>, vector<1x1x16x256xf32>
    %99 = vector.shape_cast %98 : vector<1x1x16x256xf32> to vector<16x256xf32>
    %100 = vector.extract_strided_slice %97 {offsets = [0, 0], sizes = [16, 256], strides = [1, 1]} : vector<64x256xf32> to vector<16x256xf32>
    %101 = arith.mulf %99, %100 : vector<16x256xf32>
    %102 = vector.shape_cast %101 : vector<16x256xf32> to vector<1x16x256xf32>
    %cst_58 = arith.constant dense<0.000000e+00> : vector<1xf32>
    %103 = vector.multi_reduction <add>, %102, %cst_58 [1, 2] : vector<1x16x256xf32> to vector<1xf32>
    %104 = vector.shape_cast %103 : vector<1xf32> to vector<1x1x1xf32>
    %105 = vector.extract %104[0, 0, 0] : f32 from vector<1x1x1xf32>
    %106 = vector.extract_strided_slice %97 {offsets = [16, 0], sizes = [16, 256], strides = [1, 1]} : vector<64x256xf32> to vector<16x256xf32>
    %107 = arith.mulf %99, %106 : vector<16x256xf32>
    %108 = vector.shape_cast %107 : vector<16x256xf32> to vector<1x16x256xf32>
    %cst_59 = arith.constant dense<0.000000e+00> : vector<1xf32>
    %109 = vector.multi_reduction <add>, %108, %cst_59 [1, 2] : vector<1x16x256xf32> to vector<1xf32>
    %110 = vector.shape_cast %109 : vector<1xf32> to vector<1x1x1xf32>
    %111 = vector.extract %110[0, 0, 0] : f32 from vector<1x1x1xf32>
    %cst_60 = arith.constant 9.99999997E-7 : f32
    %112 = arith.addf %111, %cst_60 : f32
    %113 = arith.divf %105, %112 : f32
    %c0_61 = arith.constant 0 : index
    %c1_62 = arith.constant 1 : index
    %c0_63 = arith.constant 0 : index
    %c0_64 = arith.constant 0 : index
    %114 = vector.load %arg1[%c0_61, %c1_62, %c0_63, %c0_64] : memref<1x2x16x256xf32, #tpu.memory_space<vmem>>, vector<1x1x16x256xf32>
    %115 = vector.shape_cast %114 : vector<1x1x16x256xf32> to vector<16x256xf32>
    %116 = vector.extract_strided_slice %97 {offsets = [32, 0], sizes = [16, 256], strides = [1, 1]} : vector<64x256xf32> to vector<16x256xf32>
    %117 = arith.mulf %115, %116 : vector<16x256xf32>
    %118 = vector.shape_cast %117 : vector<16x256xf32> to vector<1x16x256xf32>
    %cst_65 = arith.constant dense<0.000000e+00> : vector<1xf32>
    %119 = vector.multi_reduction <add>, %118, %cst_65 [1, 2] : vector<1x16x256xf32> to vector<1xf32>
    %120 = vector.shape_cast %119 : vector<1xf32> to vector<1x1x1xf32>
    %121 = vector.extract %120[0, 0, 0] : f32 from vector<1x1x1xf32>
    %122 = vector.extract_strided_slice %97 {offsets = [48, 0], sizes = [16, 256], strides = [1, 1]} : vector<64x256xf32> to vector<16x256xf32>
    %123 = arith.mulf %115, %122 : vector<16x256xf32>
    %124 = vector.shape_cast %123 : vector<16x256xf32> to vector<1x16x256xf32>
    %cst_66 = arith.constant dense<0.000000e+00> : vector<1xf32>
    %125 = vector.multi_reduction <add>, %124, %cst_66 [1, 2] : vector<1x16x256xf32> to vector<1xf32>
    %126 = vector.shape_cast %125 : vector<1xf32> to vector<1x1x1xf32>
    %127 = vector.extract %126[0, 0, 0] : f32 from vector<1x1x1xf32>
    %cst_67 = arith.constant 9.99999997E-7 : f32
    %128 = arith.addf %127, %cst_67 : f32
    %129 = arith.divf %121, %128 : f32
    %130 = vector.broadcast %113 : f32 to vector<1xf32>
    %131 = vector.broadcast %129 : f32 to vector<1xf32>
    %132 = tpu.concatenate %130, %131 in 0 : vector<1xf32>, vector<1xf32> -> vector<2xf32>
    %133 = vector.shape_cast %132 : vector<2xf32> to vector<1x1x2xf32>
    %c0_68 = arith.constant 0 : index
    %c0_69 = arith.constant 0 : index
    %c0_70 = arith.constant 0 : index
    %134 = vector.load %arg5[%c0_68, %c0_69, %c0_70] : memref<1x1x2xf32, #tpu.memory_space<vmem>>, vector<1x1x2xf32>
    tpu.vector_store %arg5[%c0_68, %c0_69, %c0_70], %133 {strides = array<i32>} : memref<1x1x2xf32, #tpu.memory_space<vmem>>, vector<1x1x2xf32>,
    return
  }
  func.func @transform_0(%arg0: i32) -> (i32, i32, i32, i32) {
    %c0_i32 = arith.constant 0 : i32
    %c0_i32_0 = arith.constant 0 : i32
    %c0_i32_1 = arith.constant 0 : i32
    %c0_i32_2 = arith.constant 0 : i32
    return %arg0, %c0_i32, %c0_i32_0, %c0_i32_1 : i32, i32, i32, i32
  }
  func.func @transform_1(%arg0: i32) -> (i32, i32, i32, i32) {
    %c0_i32 = arith.constant 0 : i32
    %c0_i32_0 = arith.constant 0 : i32
    %c0_i32_1 = arith.constant 0 : i32
    %c0_i32_2 = arith.constant 0 : i32
    return %arg0, %c0_i32, %c0_i32_0, %c0_i32_1 : i32, i32, i32, i32
  }
  func.func @transform_2(%arg0: i32) -> (i32, i32) {
    %c0_i32 = arith.constant 0 : i32
    %c0_i32_0 = arith.constant 0 : i32
    %c0_i32_1 = arith.constant 0 : i32
    return %c0_i32, %c0_i32_0 : i32, i32
  }
  func.func @transform_3(%arg0: i32) -> (i32, i32) {
    %c0_i32 = arith.constant 0 : i32
    %c0_i32_0 = arith.constant 0 : i32
    %c0_i32_1 = arith.constant 0 : i32
    return %c0_i32, %c0_i32_0 : i32, i32
  }
  func.func @transform_4(%arg0: i32) -> (i32, i32, i32) {
    %c0_i32 = arith.constant 0 : i32
    %c0_i32_0 = arith.constant 0 : i32
    %c0_i32_1 = arith.constant 0 : i32
    return %arg0, %c0_i32, %c0_i32_0 : i32, i32, i32
  }
}

</mosaic_0001>

<llo_original>
// kernel: tpu_custom_call.1
$region0: #{tpu_custom_call.1}
  #allocation0 [shape = 'u32[]', space=smem, size = 0x4, offset = 0x4, fixed_abs, tag = 'smem constant byte address 0x4 - core index']
  #allocation1 [shape = 'u32[72,128]{1,0:T(1,128)}', space=vmem, size = 0x9000, scoped, tag = 'internal scratch']
  #allocation2 [shape = 'bf16[64,256]{1,0:T(8,128)(2,1)}', space=vmem, size = 0x8000, scoped, tag = 'scratch operand']
  %s0 = inlined_call_operand.hbm [shape: f32[2,2,16,256], index: 0, kind: input, shape index: {}]
  %s1 = inlined_call_operand.hbm [shape: f32[2,2,16,256], index: 1, kind: input, shape index: {}]
  %s2 = inlined_call_operand.hbm [shape: bf16[64,64], index: 2, kind: input, shape index: {}]
  %s3 = inlined_call_operand.hbm [shape: bf16[256,256], index: 3, kind: input, shape index: {}]
  %s4 = inlined_call_operand.hbm [shape: f32[2,1,2], index: 4, kind: output, shape index: {}]
  %s5 = sld [smem:[#allocation0]]
  $region65: #{tpu_custom_call.1} parent=0
    _
  %s7 = ssub.s32 1, %s5
  %s8 = scalar_select 0, %s7, %s5
  $region1: #{tpu_custom_call.1} parent=0
    #allocation3 [shape = 'u8[65536]{0}', space=vmem, size = 0x10000, scoped, tag = 'input window, operand 0']
    #allocation4 [shape = 's32[2]{0}', space=sflag, size = 0x8, scoped, tag = 'scoped memory for tpu_custom_call.1']
    #allocation5 [shape = 's32[2]{0}', space=sflag, size = 0x8, scoped, tag = 'scoped memory for tpu_custom_call.1']
    #allocation6 [shape = 'u8[65536]{0}', space=vmem, size = 0x10000, scoped, tag = 'input window, operand 1']
    #allocation7 [shape = 's32[2]{0}', space=sflag, size = 0x8, scoped, tag = 'scoped memory for tpu_custom_call.1']
    #allocation8 [shape = 'u8[16384]{0}', space=vmem, size = 0x4000, scoped, tag = 'input window, operand 2, single buffered']
    #allocation9 [shape = 'u8[131072]{0}', space=vmem, size = 0x20000, scoped, tag = 'input window, operand 3, single buffered']
    #allocation10 [shape = 's32[1]{0}', space=sflag, size = 0x4, scoped, tag = 'scoped memory for tpu_custom_call.1']
    #allocation11 [shape = 'u8[1024]{0}', space=vmem, size = 0x400, scoped, tag = 'output window, operand 0']
    %9 = vsyncpa [#allocation4], 0
    %s10 = scalar_lea.sflag [#allocation4], 1
    %11 = vsyncpa %s10, 0
    %12 = vsyncpa [#allocation7], 0
    %s13 = scalar_lea.sflag [#allocation7], 1
    %14 = vsyncpa %s13, 0
    %15 = vsyncpa [#allocation10], 0
    %16 = vsyncpa [#allocation5], 0
    %s17 = scalar_lea.sflag [#allocation5], 1
    %18 = vsyncpa %s17, 0
    loop: start=0, step=1, limit=4
    $region2: #{tpu_custom_call.1} parent=1 // loop_pre_header
      _
    $region3: #{tpu_custom_call.1} parent=1 // loop_header
      %s20 = sphi 0, %s24
      %p21 = scmp.ge.s32.totalorder %s20, 4
      %s30 = sphi 0, %s32
      %s33 = sphi 0, %s30
      %s34 = sphi 0, %s33
      %s50 = sphi 0, %s34
      %s56 = sphi 0, %s58
      %s59 = sphi 0, %s56
      %s60 = sphi 0, %s59
      %s76 = sphi 0, %s60
      %s80 = sphi 0, %s80
      %s82 = sphi 0, %s80
      %s83 = sphi 0, %s82
      %s97 = sphi 0, %s83
      %s101 = sphi 0, %s101
      %s103 = sphi 0, %s101
      %s104 = sphi 0, %s103
      %s118 = sphi 0, %s104
      %s124 = sphi 0, %s126
      %s127 = sphi 0, %s124
      %s128 = sphi 0, %s127
      %s144 = sphi 0, %s128
    $region4: #{tpu_custom_call.1} parent=1 // loop_header_branch
      %23 = sbr.rel (%p21) target = $region8
    $region5: #{tpu_custom_call.1} parent=1 // loop_body
      %s25 = ssub.s32 %s20, 1
      %s26 = ssub.s32 %s20, 2
      %s27 = sadd.s32 %s20, 1
      %s28 = ssub.s32 %s20, %s27
      %p29 = scmp.eq.s32.totalorder %s28, 0
      %s31 = sadd.s32 %s30, 1
      %s32 = scalar_select %p29, %s30, %s31
      %p35 = pneg %p29
      %p36 = scmp.eq.s32.totalorder %s20, 1
      %p37 = por %p35, %p36
      %p38 = scmp.ne.s32.totalorder %s30, %s33
      %p39 = scmp.eq.s32.totalorder %s20, 0
      %p40 = por %p38, %p39
      %p41 = scmp.ne.s32.totalorder %s30, %s33
      %p42 = scmp.eq.s32.totalorder %s25, 1
      %p43 = por %p41, %p42
      %p44 = scmp.ne.s32.totalorder %s33, %s34
      %p45 = scmp.eq.s32.totalorder %s25, 0
      %p46 = por %p44, %p45
      %p47 = scmp.ne.s32.totalorder %s33, %s34
      %p48 = scmp.eq.s32.totalorder %s26, 1
      %p49 = por %p47, %p48
      %p51 = scmp.ne.s32.totalorder %s34, %s50
      %p52 = scmp.eq.s32.totalorder %s26, 0
      %p53 = por %p51, %p52
      %s54 = ssub.s32 %s20, %s27
      %p55 = scmp.eq.s32.totalorder %s54, 0
      %s57 = sadd.s32 %s56, 1
      %s58 = scalar_select %p55, %s56, %s57
      %p61 = pneg %p55
      %p62 = scmp.eq.s32.totalorder %s20, 1
      %p63 = por %p61, %p62
      %p64 = scmp.ne.s32.totalorder %s56, %s59
      %p65 = scmp.eq.s32.totalorder %s20, 0
      %p66 = por %p64, %p65
      %p67 = scmp.ne.s32.totalorder %s56, %s59
      %p68 = scmp.eq.s32.totalorder %s25, 1
      %p69 = por %p67, %p68
      %p70 = scmp.ne.s32.totalorder %s59, %s60
      %p71 = scmp.eq.s32.totalorder %s25, 0
      %p72 = por %p70, %p71
      %p73 = scmp.ne.s32.totalorder %s59, %s60
      %p74 = scmp.eq.s32.totalorder %s26, 1
      %p75 = por %p73, %p74
      %p77 = scmp.ne.s32.totalorder %s60, %s76
      %p78 = scmp.eq.s32.totalorder %s26, 0
      %p79 = por %p77, %p78
      %s81 = sadd.s32 %s80, 1
      %p84 = scmp.eq.s32.totalorder %s20, 1
      %p85 = scmp.ne.s32.totalorder %s80, %s82
      %p86 = scmp.eq.s32.totalorder %s20, 0
      %p87 = por %p85, %p86
      %p88 = scmp.ne.s32.totalorder %s80, %s82
      %p89 = scmp.eq.s32.totalorder %s25, 1
      %p90 = por %p88, %p89
      %p91 = scmp.ne.s32.totalorder %s82, %s83
      %p92 = scmp.eq.s32.totalorder %s25, 0
      %p93 = por %p91, %p92
      %p94 = scmp.ne.s32.totalorder %s82, %s83
      %p95 = scmp.eq.s32.totalorder %s26, 1
      %p96 = por %p94, %p95
      %p98 = scmp.ne.s32.totalorder %s83, %s97
      %p99 = scmp.eq.s32.totalorder %s26, 0
      %p100 = por %p98, %p99
      %s102 = sadd.s32 %s101, 1
      %p105 = scmp.eq.s32.totalorder %s20, 1
      %p106 = scmp.ne.s32.totalorder %s101, %s103
      %p107 = scmp.eq.s32.totalorder %s20, 0
      %p108 = por %p106, %p107
      %p109 = scmp.ne.s32.totalorder %s101, %s103
      %p110 = scmp.eq.s32.totalorder %s25, 1
      %p111 = por %p109, %p110
      %p112 = scmp.ne.s32.totalorder %s103, %s104
      %p113 = scmp.eq.s32.totalorder %s25, 0
      %p114 = por %p112, %p113
      %p115 = scmp.ne.s32.totalorder %s103, %s104
      %p116 = scmp.eq.s32.totalorder %s26, 1
      %p117 = por %p115, %p116
      %p119 = scmp.ne.s32.totalorder %s104, %s118
      %p120 = scmp.eq.s32.totalorder %s26, 0
      %p121 = por %p119, %p120
      %s122 = ssub.s32 %s20, %s27
      %p123 = scmp.eq.s32.totalorder %s122, 0
      %s125 = sadd.s32 %s124, 1
      %s126 = scalar_select %p123, %s124, %s125
      %p129 = pneg %p123
      %p130 = scmp.eq.s32.totalorder %s20, 1
      %p131 = por %p129, %p130
      %p132 = scmp.ne.s32.totalorder %s124, %s127
      %p133 = scmp.eq.s32.totalorder %s20, 0
      %p134 = por %p132, %p133
      %p135 = scmp.ne.s32.totalorder %s124, %s127
      %p136 = scmp.eq.s32.totalorder %s25, 1
      %p137 = por %p135, %p136
      %p138 = scmp.ne.s32.totalorder %s127, %s128
      %p139 = scmp.eq.s32.totalorder %s25, 0
      %p140 = por %p138, %p139
      %p141 = scmp.ne.s32.totalorder %s127, %s128
      %p142 = scmp.eq.s32.totalorder %s26, 1
      %p143 = por %p141, %p142
      %p145 = scmp.ne.s32.totalorder %s128, %s144
      %p146 = scmp.eq.s32.totalorder %s26, 0
      %p147 = por %p145, %p146
      %p148 = scmp.le.s32.totalorder 1, %s20
      %p149 = scmp.lt.s32.totalorder %s20, 3
      %p150 = pnand %p148, %p149
      %p151 = pneg %p150
      // Predicated region
      $region9: #{tpu_custom_call.1} parent=5 // pred_check
        _
      $region10: #{tpu_custom_call.1} parent=5 // pred_check_branch
        %153 = sbr.rel (%p150) target = $region12
      $region11: #{tpu_custom_call.1} parent=5 // pred_region
        %s154 = ssub.s32 %s20, 1
        // Predicated region
        $region13: #{tpu_custom_call.1} parent=11 // pred_check
          %p155 = pneg %p93
        $region14: #{tpu_custom_call.1} parent=11 // pred_check_branch
          %157 = sbr.rel (%p155) target = $region16
        $region15: #{tpu_custom_call.1} parent=11 // pred_region
          %159 = vsyncadd [#allocation7], 0
          %s160 = sshll.u32 %s2, 4
          %s161 = int_to_ptr.hbm [resolvable:$true] %s160
          %s162 = sshll.u32 [#allocation8], 4
          %s163 = int_to_ptr.vmem [resolvable:$true] %s162
          %168 = dma.hbm_to_vmem [thread:$0]  %s161, 512, %s163, [#allocation7], 64, 64, 4
        $region16: #{tpu_custom_call.1} parent=11 // pred_fallthru
          _
        // Predicated region
        $region17: #{tpu_custom_call.1} parent=11 // pred_check
          %p169 = pneg %p114
        $region18: #{tpu_custom_call.1} parent=11 // pred_check_branch
          %171 = sbr.rel (%p169) target = $region20
        $region19: #{tpu_custom_call.1} parent=11 // pred_region
          %173 = vsyncadd [#allocation10], 0
          %s174 = sshll.u32 %s3, 4
          %s175 = int_to_ptr.hbm [resolvable:$true] %s174
          %s176 = sshll.u32 [#allocation9], 4
          %s177 = int_to_ptr.vmem [resolvable:$true] %s176
          %182 = dma.hbm_to_vmem [thread:$0]  %s175, 4096, %s177, [#allocation10], 128, 128, 8
        $region20: #{tpu_custom_call.1} parent=11 // pred_fallthru
          _
      $region12: #{tpu_custom_call.1} parent=5 // pred_fallthru
        _
      %p183 = scmp.lt.s32.totalorder %s20, 2
      // Predicated region
      $region21: #{tpu_custom_call.1} parent=5 // pred_check
        %p184 = pneg %p183
      $region22: #{tpu_custom_call.1} parent=5 // pred_check_branch
        %186 = sbr.rel (%p184) target = $region24
      $region23: #{tpu_custom_call.1} parent=5 // pred_region
        // Predicated region
        $region25: #{tpu_custom_call.1} parent=23 // pred_check
          %p187 = pneg %p40
        $region26: #{tpu_custom_call.1} parent=23 // pred_check_branch
          %189 = sbr.rel (%p187) target = $region28
        $region27: #{tpu_custom_call.1} parent=23 // pred_region
          %s190 = sand.u32 %s30, 1
          %s191 = scalar_lea.sflag [#allocation4], %s190
          %s192 = sand.u32 %s30, 1
          %s193 = smul.addr %s192, 64
          %s194 = scalar_lea.vmem [#allocation3], %s193
          %196 = vsyncadd %s191, 0
          %s197 = smul.addr %s20, 8
          %s198 = smul.addr %s197, 8
          %s199 = scalar_lea.hbm %s0, %s198
          %s200 = sshll.u32 %s199, 4
          %s201 = int_to_ptr.hbm [resolvable:$true] %s200
          %s202 = sshll.u32 %s194, 4
          %s203 = int_to_ptr.vmem [resolvable:$true] %s202
          %208 = dma.hbm_to_vmem [thread:$0]  %s201, 1024, %s203, %s191, 256, 256, 16
        $region28: #{tpu_custom_call.1} parent=23 // pred_fallthru
          _
        // Predicated region
        $region29: #{tpu_custom_call.1} parent=23 // pred_check
          %p209 = pneg %p66
        $region30: #{tpu_custom_call.1} parent=23 // pred_check_branch
          %211 = sbr.rel (%p209) target = $region32
        $region31: #{tpu_custom_call.1} parent=23 // pred_region
          %s212 = sand.u32 %s20, 1
          %s213 = scalar_lea.sflag [#allocation7], %s212
          %s214 = sand.u32 %s56, 1
          %s215 = smul.addr %s214, 64
          %s216 = scalar_lea.vmem [#allocation6], %s215
          %218 = vsyncadd %s213, 0
          %s219 = smul.addr %s20, 8
          %s220 = smul.addr %s219, 8
          %s221 = scalar_lea.hbm %s1, %s220
          %s222 = sshll.u32 %s221, 4
          %s223 = int_to_ptr.hbm [resolvable:$true] %s222
          %s224 = sshll.u32 %s216, 4
          %s225 = int_to_ptr.vmem [resolvable:$true] %s224
          %230 = dma.hbm_to_vmem [thread:$0]  %s223, 1024, %s225, %s213, 256, 256, 16
        $region32: #{tpu_custom_call.1} parent=23 // pred_fallthru
          _
      $region24: #{tpu_custom_call.1} parent=5 // pred_fallthru
        _
      %p231 = scmp.le.s32.totalorder 1, %s20
      %p232 = scmp.lt.s32.totalorder %s20, 3
      %p233 = pnand %p231, %p232
      %p234 = pneg %p233
      // Predicated region
      $region33: #{tpu_custom_call.1} parent=5 // pred_check
        _
      $region34: #{tpu_custom_call.1} parent=5 // pred_check_branch
        %236 = sbr.rel (%p233) target = $region36
      $region35: #{tpu_custom_call.1} parent=5 // pred_region
        %s237 = ssub.s32 %s20, 1
        %s238 = sand.u32 %s33, 1
        %s239 = scalar_lea.sflag [#allocation4], %s238
        %s240 = sand.u32 %s33, 1
        %s241 = smul.addr %s240, 64
        %s242 = scalar_lea.vmem [#allocation3], %s241
        // Predicated region
        $region37: #{tpu_custom_call.1} parent=35 // pred_check
          %p243 = pneg %p46
        $region38: #{tpu_custom_call.1} parent=35 // pred_check_branch
          %245 = sbr.rel (%p243) target = $region40
        $region39: #{tpu_custom_call.1} parent=35 // pred_region
          %247 = dma.done %s239, 1024
        $region40: #{tpu_custom_call.1} parent=35 // pred_fallthru
          _
        %s248 = sand.u32 %s25, 1
        %s249 = scalar_lea.sflag [#allocation7], %s248
        %s250 = sand.u32 %s59, 1
        %s251 = smul.addr %s250, 64
        %s252 = scalar_lea.vmem [#allocation6], %s251
        // Predicated region
        $region41: #{tpu_custom_call.1} parent=35 // pred_check
          %p253 = pneg %p72
        $region42: #{tpu_custom_call.1} parent=35 // pred_check_branch
          %255 = sbr.rel (%p253) target = $region44
        $region43: #{tpu_custom_call.1} parent=35 // pred_region
          %257 = dma.done %s249, 1024
        $region44: #{tpu_custom_call.1} parent=35 // pred_fallthru
          _
        // Predicated region
        $region45: #{tpu_custom_call.1} parent=35 // pred_check
          %p258 = pneg %p93
        $region46: #{tpu_custom_call.1} parent=35 // pred_check_branch
          %260 = sbr.rel (%p258) target = $region48
        $region47: #{tpu_custom_call.1} parent=35 // pred_region
          %262 = dma.done [#allocation7], 512
        $region48: #{tpu_custom_call.1} parent=35 // pred_fallthru
          _
        // Predicated region
        $region49: #{tpu_custom_call.1} parent=35 // pred_check
          %p263 = pneg %p114
        $region50: #{tpu_custom_call.1} parent=35 // pred_check_branch
          %265 = sbr.rel (%p263) target = $region52
        $region51: #{tpu_custom_call.1} parent=35 // pred_region
          %267 = dma.done [#allocation10], 4096
        $region52: #{tpu_custom_call.1} parent=35 // pred_fallthru
          _
        %s268 = sand.u32 %s33, 1
        %s269 = scalar_lea.sflag [#allocation4], %s268
        %s270 = sand.u32 %s33, 1
        %s271 = smul.addr %s270, 64
        %s272 = scalar_lea.vmem [#allocation3], %s271
        %p273 = pneg %p46
        %p274 = pneg %p43
        %s275 = sand.u32 %s25, 1
        %s276 = scalar_lea.sflag [#allocation7], %s275
        %s277 = sand.u32 %s59, 1
        %s278 = smul.addr %s277, 64
        %s279 = scalar_lea.vmem [#allocation6], %s278
        %p280 = pneg %p72
        %p281 = pneg %p69
        %p282 = pneg %p93
        %p283 = pneg %p90
        %p284 = pneg %p114
        %p285 = pneg %p111
        %p286 = pneg %p140
        %p287 = pneg %p137
        %s288 = sand.u32 %s127, 1
        %s289 = scalar_lea.sflag [#allocation5], %s288
        %s290 = sand.u32 %s127, 1
        %s291 = scalar_lea.vmem [#allocation11], %s290
        %v293 = vld [vmem:[%s242] sm:$0xff]
        %v294 = vld [vmem:[%s242 + $0x8] sm:$0xff]
        %v295 = vld [vmem:[%s242 + $0x10] sm:$0xff]
        %v296 = vld [vmem:[%s242 + $0x18] sm:$0xff]
        %v297 = vadd.f32 %v293, %v294
        %v298 = vadd.f32 %v297, %v295
        %v299 = vadd.f32 %v298, %v296
        %300 = vadd.xlane.f32.xlu0 %v299
        %v301 = vpop.xlane.xlu0 %300
        %v302 = vrot.slane %v301, 4
        %v303 = vadd.f32 %v301, %v302
        %v304 = vrot.slane %v303, 2
        %v305 = vadd.f32 %v303, %v304
        %v306 = vrot.slane %v305, 1
        %v307 = vadd.f32 %v305, %v306
        %s308 = vtos %v307
        %s309 = smul.f32 %s308, 0.00024414063
        %s310 = sadd.f32 %s309, 1e-05
        %v311 = vld [vmem:[%s252] sm:$0xff]
        %v312 = vld [vmem:[%s252 + $0x8] sm:$0xff]
        %v313 = vld [vmem:[%s252 + $0x10] sm:$0xff]
        %v314 = vld [vmem:[%s252 + $0x18] sm:$0xff]
        %v315 = vmul.f32 %v311, %v293
        %v316 = vmul.f32 %v312, %v294
        %v317 = vmul.f32 %v313, %v295
        %v318 = vmul.f32 %v314, %v296
        %v319 = vadd.f32 %v315, %v316
        %v320 = vadd.f32 %v319, %v317
        %v321 = vadd.f32 %v320, %v318
        %322 = vadd.xlane.f32.xlu0 %v321
        %v323 = vpop.xlane.xlu0 %322
        %v324 = vrot.slane %v323, 4
        %v325 = vadd.f32 %v323, %v324
        %v326 = vrot.slane %v325, 2
        %v327 = vadd.f32 %v325, %v326
        %v328 = vrot.slane %v327, 1
        %v329 = vadd.f32 %v327, %v328
        %s330 = vtos %v329
        %s331 = smul.f32 %s330, 0.00024414063
        %v332 = vstv %s310
        %v333 = vrcp.pop %v332
        %v334 = vmul.f32 %v332, %v333
        %v335 = vsub.f32 1.0, %v334
        %v336 = vmul.f32 %v333, %v335
        %v337 = vadd.f32 %v333, %v336
        %vm338 = vweird.f32 %v332
        %vm339 = vweird.f32 %v333
        %vm340 = vmor %vm338, %vm339
        %v341 = vsel %vm340, %v333, %v337
        %v342 = vand.u32 2147483647, %v332
        %vm343 = vcmp.eq.f32.partialorder %v342, 8.507059e+37
        %v344 = vand.u32 %v332, 2147483648
        %v345 = vor.u32 1.1754944e-38, %v344
        %v346 = vsel %vm343, %v345, %v341
        %s347 = vtos %v346
        %s348 = smul.f32 %s331, %s347
        %v349 = vstv %s348
        %v350 = vsub.f32 %v311, %v349
        %v351 = vsub.f32 %v312, %v349
        %v352 = vsub.f32 %v313, %v349
        %v353 = vsub.f32 %v314, %v349
        %v354 = vmul.f32 %v350, %v350
        %v355 = vmul.f32 %v351, %v351
        %v356 = vmul.f32 %v352, %v352
        %v357 = vmul.f32 %v353, %v353
        %v358 = vadd.f32 %v354, 0.0
        %v359 = vadd.f32 %v355, 0.0
        %v360 = vadd.f32 %v356, 0.0
        %v361 = vadd.f32 %v357, 0.0
        %s362 = scalar_lea.vmem %s252, 32 [#allocation6]
        %v363 = vld [vmem:[%s362] sm:$0xff]
        %v364 = vld [vmem:[%s362 + $0x8] sm:$0xff]
        %v365 = vld [vmem:[%s362 + $0x10] sm:$0xff]
        %v366 = vld [vmem:[%s362 + $0x18] sm:$0xff]
        %v367 = vmul.f32 %v363, %v293
        %v368 = vmul.f32 %v364, %v294
        %v369 = vmul.f32 %v365, %v295
        %v370 = vmul.f32 %v366, %v296
        %v371 = vadd.f32 %v367, %v368
        %v372 = vadd.f32 %v371, %v369
        %v373 = vadd.f32 %v372, %v370
        %374 = vadd.xlane.f32.xlu0 %v373
        %v375 = vpop.xlane.xlu0 %374
        %v376 = vrot.slane %v375, 4
        %v377 = vadd.f32 %v375, %v376
        %v378 = vrot.slane %v377, 2
        %v379 = vadd.f32 %v377, %v378
        %v380 = vrot.slane %v379, 1
        %v381 = vadd.f32 %v379, %v380
        %s382 = vtos %v381
        %s383 = smul.f32 %s382, 0.00024414063
        %v384 = vstv %s310
        %v385 = vrcp.pop %v384
        %v386 = vmul.f32 %v384, %v385
        %v387 = vsub.f32 1.0, %v386
        %v388 = vmul.f32 %v385, %v387
        %v389 = vadd.f32 %v385, %v388
        %vm390 = vweird.f32 %v384
        %vm391 = vweird.f32 %v385
        %vm392 = vmor %vm390, %vm391
        %v393 = vsel %vm392, %v385, %v389
        %v394 = vand.u32 2147483647, %v384
        %vm395 = vcmp.eq.f32.partialorder %v394, 8.507059e+37
        %v396 = vand.u32 %v384, 2147483648
        %v397 = vor.u32 1.1754944e-38, %v396
        %v398 = vsel %vm395, %v397, %v393
        %s399 = vtos %v398
        %s400 = smul.f32 %s383, %s399
        %v401 = vstv %s400
        %v402 = vsub.f32 %v363, %v401
        %v403 = vsub.f32 %v364, %v401
        %v404 = vsub.f32 %v365, %v401
        %v405 = vsub.f32 %v366, %v401
        %v406 = vmul.f32 %v402, %v402
        %v407 = vmul.f32 %v403, %v403
        %v408 = vmul.f32 %v404, %v404
        %v409 = vmul.f32 %v405, %v405
        %v410 = vadd.f32 %v358, %v406
        %v411 = vadd.f32 %v359, %v407
        %v412 = vadd.f32 %v360, %v408
        %v413 = vadd.f32 %v361, %v409
        %v414 = vmul.f32 %v410, %v410
        %v415 = vmul.f32 %v411, %v411
        %v416 = vmul.f32 %v412, %v412
        %v417 = vmul.f32 %v413, %v413
        %v418 = vsub.f32 0.0, %v414
        %v419 = vsub.f32 0.0, %v415
        %v420 = vsub.f32 0.0, %v416
        %v421 = vsub.f32 0.0, %v417
        %v422 = vmul.f32 %v418, 0.25
        %v423 = vmul.f32 %v419, 0.25
        %v424 = vmul.f32 %v420, 0.25
        %v425 = vmul.f32 %v421, 0.25
        %v426 = vmul.f32 %v422, 1.442695
        %v427 = vpow.pop %v426
        %v428 = vmul.f32 %v423, 1.442695
        %v429 = vpow.pop %v428
        %v430 = vmul.f32 %v424, 1.442695
        %v431 = vpow.pop %v430
        %v432 = vmul.f32 %v425, 1.442695
        %v433 = vpow.pop %v432
        %v434 = vmul.f32 %v293, %v427
        %v435 = vmul.f32 %v294, %v429
        %v436 = vmul.f32 %v295, %v431
        %v437 = vmul.f32 %v296, %v433
        %v438 = vpack.c.bf16 %v435, %v434
        %v439 = vpack.c.bf16 %v437, %v436
        %440 = vst [vmem:[#allocation2] sm:$0xff] %v438
        %441 = vst [vmem:[#allocation2 + $0x8] sm:$0xff] %v439
        %v442 = vpack.c.bf16 %v429, %v427
        %v443 = vpack.c.bf16 %v433, %v431
        %444 = vst [vmem:[#allocation2 + $0x10] sm:$0xff] %v442
        %445 = vst [vmem:[#allocation2 + $0x18] sm:$0xff] %v443
        %s446 = scalar_lea.vmem %s242, 32 [#allocation3]
        %v447 = vld [vmem:[%s446] sm:$0xff]
        %v448 = vld [vmem:[%s446 + $0x8] sm:$0xff]
        %v449 = vld [vmem:[%s446 + $0x10] sm:$0xff]
        %v450 = vld [vmem:[%s446 + $0x18] sm:$0xff]
        %v451 = vadd.f32 %v447, %v448
        %v452 = vadd.f32 %v451, %v449
        %v453 = vadd.f32 %v452, %v450
        %454 = vadd.xlane.f32.xlu0 %v453
        %v455 = vpop.xlane.xlu0 %454
        %v456 = vrot.slane %v455, 4
        %v457 = vadd.f32 %v455, %v456
        %v458 = vrot.slane %v457, 2
        %v459 = vadd.f32 %v457, %v458
        %v460 = vrot.slane %v459, 1
        %v461 = vadd.f32 %v459, %v460
        %s462 = vtos %v461
        %s463 = smul.f32 %s462, 0.00024414063
        %s464 = sadd.f32 %s463, 1e-05
        %v465 = vld [vmem:[%s252] sm:$0xff]
        %v466 = vld [vmem:[%s252 + $0x8] sm:$0xff]
        %v467 = vld [vmem:[%s252 + $0x10] sm:$0xff]
        %v468 = vld [vmem:[%s252 + $0x18] sm:$0xff]
        %v469 = vmul.f32 %v465, %v447
        %v470 = vmul.f32 %v466, %v448
        %v471 = vmul.f32 %v467, %v449
        %v472 = vmul.f32 %v468, %v450
        %v473 = vadd.f32 %v469, %v470
        %v474 = vadd.f32 %v473, %v471
        %v475 = vadd.f32 %v474, %v472
        %476 = vadd.xlane.f32.xlu0 %v475
        %v477 = vpop.xlane.xlu0 %476
        %v478 = vrot.slane %v477, 4
        %v479 = vadd.f32 %v477, %v478
        %v480 = vrot.slane %v479, 2
        %v481 = vadd.f32 %v479, %v480
        %v482 = vrot.slane %v481, 1
        %v483 = vadd.f32 %v481, %v482
        %s484 = vtos %v483
        %s485 = smul.f32 %s484, 0.00024414063
        %v486 = vstv %s464
        %v487 = vrcp.pop %v486
        %v488 = vmul.f32 %v486, %v487
        %v489 = vsub.f32 1.0, %v488
        %v490 = vmul.f32 %v487, %v489
        %v491 = vadd.f32 %v487, %v490
        %vm492 = vweird.f32 %v486
        %vm493 = vweird.f32 %v487
        %vm494 = vmor %vm492, %vm493
        %v495 = vsel %vm494, %v487, %v491
        %v496 = vand.u32 2147483647, %v486
        %vm497 = vcmp.eq.f32.partialorder %v496, 8.507059e+37
        %v498 = vand.u32 %v486, 2147483648
        %v499 = vor.u32 1.1754944e-38, %v498
        %v500 = vsel %vm497, %v499, %v495
        %s501 = vtos %v500
        %s502 = smul.f32 %s485, %s501
        %v503 = vstv %s502
        %v504 = vsub.f32 %v465, %v503
        %v505 = vsub.f32 %v466, %v503
        %v506 = vsub.f32 %v467, %v503
        %v507 = vsub.f32 %v468, %v503
        %v508 = vmul.f32 %v504, %v504
        %v509 = vmul.f32 %v505, %v505
        %v510 = vmul.f32 %v506, %v506
        %v511 = vmul.f32 %v507, %v507
        %v512 = vadd.f32 %v508, 0.0
        %v513 = vadd.f32 %v509, 0.0
        %v514 = vadd.f32 %v510, 0.0
        %v515 = vadd.f32 %v511, 0.0
        %v516 = vld [vmem:[%s362] sm:$0xff]
        %v517 = vld [vmem:[%s362 + $0x8] sm:$0xff]
        %v518 = vld [vmem:[%s362 + $0x10] sm:$0xff]
        %v519 = vld [vmem:[%s362 + $0x18] sm:$0xff]
        %v520 = vmul.f32 %v516, %v447
        %v521 = vmul.f32 %v517, %v448
        %v522 = vmul.f32 %v518, %v449
        %v523 = vmul.f32 %v519, %v450
        %v524 = vadd.f32 %v520, %v521
        %v525 = vadd.f32 %v524, %v522
        %v526 = vadd.f32 %v525, %v523
        %527 = vadd.xlane.f32.xlu0 %v526
        %v528 = vpop.xlane.xlu0 %527
        %v529 = vrot.slane %v528, 4
        %v530 = vadd.f32 %v528, %v529
        %v531 = vrot.slane %v530, 2
        %v532 = vadd.f32 %v530, %v531
        %v533 = vrot.slane %v532, 1
        %v534 = vadd.f32 %v532, %v533
        %s535 = vtos %v534
        %s536 = smul.f32 %s535, 0.00024414063
        %v537 = vstv %s464
        %v538 = vrcp.pop %v537
        %v539 = vmul.f32 %v537, %v538
        %v540 = vsub.f32 1.0, %v539
        %v541 = vmul.f32 %v538, %v540
        %v542 = vadd.f32 %v538, %v541
        %vm543 = vweird.f32 %v537
        %vm544 = vweird.f32 %v538
        %vm545 = vmor %vm543, %vm544
        %v546 = vsel %vm545, %v538, %v542
        %v547 = vand.u32 2147483647, %v537
        %vm548 = vcmp.eq.f32.partialorder %v547, 8.507059e+37
        %v549 = vand.u32 %v537, 2147483648
        %v550 = vor.u32 1.1754944e-38, %v549
        %v551 = vsel %vm548, %v550, %v546
        %s552 = vtos %v551
        %s553 = smul.f32 %s536, %s552
        %v554 = vstv %s553
        %v555 = vsub.f32 %v516, %v554
        %v556 = vsub.f32 %v517, %v554
        %v557 = vsub.f32 %v518, %v554
        %v558 = vsub.f32 %v519, %v554
        %v559 = vmul.f32 %v555, %v555
        %v560 = vmul.f32 %v556, %v556
        %v561 = vmul.f32 %v557, %v557
        %v562 = vmul.f32 %v558, %v558
        %v563 = vadd.f32 %v512, %v559
        %v564 = vadd.f32 %v513, %v560
        %v565 = vadd.f32 %v514, %v561
        %v566 = vadd.f32 %v515, %v562
        %v567 = vmul.f32 %v563, %v563
        %v568 = vmul.f32 %v564, %v564
        %v569 = vmul.f32 %v565, %v565
        %v570 = vmul.f32 %v566, %v566
        %v571 = vsub.f32 0.0, %v567
        %v572 = vsub.f32 0.0, %v568
        %v573 = vsub.f32 0.0, %v569
        %v574 = vsub.f32 0.0, %v570
        %v575 = vmul.f32 %v571, 0.25
        %v576 = vmul.f32 %v572, 0.25
        %v577 = vmul.f32 %v573, 0.25
        %v578 = vmul.f32 %v574, 0.25
        %v579 = vmul.f32 %v575, 1.442695
        %v580 = vpow.pop %v579
        %v581 = vmul.f32 %v576, 1.442695
        %v582 = vpow.pop %v581
        %v583 = vmul.f32 %v577, 1.442695
        %v584 = vpow.pop %v583
        %v585 = vmul.f32 %v578, 1.442695
        %v586 = vpow.pop %v585
        %v587 = vmul.f32 %v447, %v580
        %v588 = vmul.f32 %v448, %v582
        %v589 = vmul.f32 %v449, %v584
        %v590 = vmul.f32 %v450, %v586
        %v591 = vpack.c.bf16 %v588, %v587
        %v592 = vpack.c.bf16 %v590, %v589
        %593 = vst [vmem:[#allocation2 + $0x20] sm:$0xff] %v591
        %594 = vst [vmem:[#allocation2 + $0x28] sm:$0xff] %v592
        %v595 = vpack.c.bf16 %v582, %v580
        %v596 = vpack.c.bf16 %v586, %v584
        %597 = vst [vmem:[#allocation2 + $0x30] sm:$0xff] %v595
        %598 = vst [vmem:[#allocation2 + $0x38] sm:$0xff] %v596
        %v599 = vld [vmem:[#allocation2] sm:$0xff]
        %v600 = vld [vmem:[#allocation2 + $0x8] sm:$0xff]
        %v601 = vld [vmem:[#allocation2 + $0x10] sm:$0xff]
        %v602 = vld [vmem:[#allocation2 + $0x18] sm:$0xff]
        %v603 = vld [vmem:[#allocation2 + $0x20] sm:$0xff]
        %v604 = vld [vmem:[#allocation2 + $0x28] sm:$0xff]
        %v605 = vld [vmem:[#allocation2 + $0x30] sm:$0xff]
        %v606 = vld [vmem:[#allocation2 + $0x38] sm:$0xff]
        %v607 = vld [vmem:[#allocation9] sm:$0xff]
        %v608 = vld [vmem:[#allocation9 + $0x8] sm:$0xff]
        %v609 = vld [vmem:[#allocation9 + $0x10] sm:$0xff]
        %v610 = vld [vmem:[#allocation9 + $0x18] sm:$0xff]
        %v611 = vld [vmem:[#allocation9 + $0x20] sm:$0xff]
        %v612 = vld [vmem:[#allocation9 + $0x28] sm:$0xff]
        %v613 = vld [vmem:[#allocation9 + $0x30] sm:$0xff]
        %v614 = vld [vmem:[#allocation9 + $0x38] sm:$0xff]
        %v615 = vld [vmem:[#allocation9 + $0x40] sm:$0xff]
        %v616 = vld [vmem:[#allocation9 + $0x48] sm:$0xff]
        %v617 = vld [vmem:[#allocation9 + $0x50] sm:$0xff]
        %v618 = vld [vmem:[#allocation9 + $0x58] sm:$0xff]
        %v619 = vld [vmem:[#allocation9 + $0x60] sm:$0xff]
        %v620 = vld [vmem:[#allocation9 + $0x68] sm:$0xff]
        %v621 = vld [vmem:[#allocation9 + $0x70] sm:$0xff]
        %v622 = vld [vmem:[#allocation9 + $0x78] sm:$0xff]
        %v623 = vld [vmem:[#allocation9 + $0x80] sm:$0xff]
        %v624 = vld [vmem:[#allocation9 + $0x88] sm:$0xff]
        %v625 = vld [vmem:[#allocation9 + $0x90] sm:$0xff]
        %v626 = vld [vmem:[#allocation9 + $0x98] sm:$0xff]
        %v627 = vld [vmem:[#allocation9 + $0xa0] sm:$0xff]
        %v628 = vld [vmem:[#allocation9 + $0xa8] sm:$0xff]
        %v629 = vld [vmem:[#allocation9 + $0xb0] sm:$0xff]
        %v630 = vld [vmem:[#allocation9 + $0xb8] sm:$0xff]
        %v631 = vld [vmem:[#allocation9 + $0xc0] sm:$0xff]
        %v632 = vld [vmem:[#allocation9 + $0xc8] sm:$0xff]
        %v633 = vld [vmem:[#allocation9 + $0xd0] sm:$0xff]
        %v634 = vld [vmem:[#allocation9 + $0xd8] sm:$0xff]
        %v635 = vld [vmem:[#allocation9 + $0xe0] sm:$0xff]
        %v636 = vld [vmem:[#allocation9 + $0xe8] sm:$0xff]
        %v637 = vld [vmem:[#allocation9 + $0xf0] sm:$0xff]
        %v638 = vld [vmem:[#allocation9 + $0xf8] sm:$0xff]
        %v647 = vunpack.c.l.b16 %v599
        %v648 = vunpack.c.h.b16 %v599
        %v649 = vunpack.c.l.b16 %v600
        %v650 = vunpack.c.h.b16 %v600
        %v651 = vunpack.c.l.b16 %v601
        %v652 = vunpack.c.h.b16 %v601
        %v653 = vunpack.c.l.b16 %v602
        %v654 = vunpack.c.h.b16 %v602
        %v655 = vunpack.c.l.b16 %v603
        %v656 = vunpack.c.h.b16 %v603
        %v657 = vunpack.c.l.b16 %v604
        %v658 = vunpack.c.h.b16 %v604
        %v659 = vunpack.c.l.b16 %v605
        %v660 = vunpack.c.h.b16 %v605
        %v661 = vunpack.c.l.b16 %v606
        %v662 = vunpack.c.h.b16 %v606
        %v663 = vpack.c.b16 %v649, %v647
        %v664 = vpack.c.b16 %v650, %v648
        %v665 = vpack.c.b16 %v653, %v651
        %v666 = vpack.c.b16 %v654, %v652
        %v667 = vpack.c.b16 %v657, %v655
        %v668 = vpack.c.b16 %v658, %v656
        %v669 = vpack.c.b16 %v661, %v659
        %v670 = vpack.c.b16 %v662, %v660
        %v711 = vunpack.c.l.b16 %v607
        %v712 = vunpack.c.h.b16 %v607
        %v713 = vunpack.c.l.b16 %v608
        %v714 = vunpack.c.h.b16 %v608
        %v715 = vunpack.c.l.b16 %v609
        %v716 = vunpack.c.h.b16 %v609
        %v717 = vunpack.c.l.b16 %v610
        %v718 = vunpack.c.h.b16 %v610
        %v719 = vunpack.c.l.b16 %v611
        %v720 = vunpack.c.h.b16 %v611
        %v721 = vunpack.c.l.b16 %v612
        %v722 = vunpack.c.h.b16 %v612
        %v723 = vunpack.c.l.b16 %v613
        %v724 = vunpack.c.h.b16 %v613
        %v725 = vunpack.c.l.b16 %v614
        %v726 = vunpack.c.h.b16 %v614
        %v727 = vunpack.c.l.b16 %v615
        %v728 = vunpack.c.h.b16 %v615
        %v729 = vunpack.c.l.b16 %v616
        %v730 = vunpack.c.h.b16 %v616
        %v731 = vunpack.c.l.b16 %v617
        %v732 = vunpack.c.h.b16 %v617
        %v733 = vunpack.c.l.b16 %v618
        %v734 = vunpack.c.h.b16 %v618
        %v735 = vunpack.c.l.b16 %v619
        %v736 = vunpack.c.h.b16 %v619
        %v737 = vunpack.c.l.b16 %v620
        %v738 = vunpack.c.h.b16 %v620
        %v739 = vunpack.c.l.b16 %v621
        %v740 = vunpack.c.h.b16 %v621
        %v741 = vunpack.c.l.b16 %v622
        %v742 = vunpack.c.h.b16 %v622
        %v743 = vunpack.c.l.b16 %v623
        %v744 = vunpack.c.h.b16 %v623
        %v745 = vunpack.c.l.b16 %v624
        %v746 = vunpack.c.h.b16 %v624
        %v747 = vunpack.c.l.b16 %v625
        %v748 = vunpack.c.h.b16 %v625
        %v749 = vunpack.c.l.b16 %v626
        %v750 = vunpack.c.h.b16 %v626
        %v751 = vunpack.c.l.b16 %v627
        %v752 = vunpack.c.h.b16 %v627
        %v753 = vunpack.c.l.b16 %v628
        %v754 = vunpack.c.h.b16 %v628
        %v755 = vunpack.c.l.b16 %v629
        %v756 = vunpack.c.h.b16 %v629
        %v757 = vunpack.c.l.b16 %v630
        %v758 = vunpack.c.h.b16 %v630
        %v759 = vunpack.c.l.b16 %v631
        %v760 = vunpack.c.h.b16 %v631
        %v761 = vunpack.c.l.b16 %v632
        %v762 = vunpack.c.h.b16 %v632
        %v763 = vunpack.c.l.b16 %v633
        %v764 = vunpack.c.h.b16 %v633
        %v765 = vunpack.c.l.b16 %v634
        %v766 = vunpack.c.h.b16 %v634
        %v767 = vunpack.c.l.b16 %v635
        %v768 = vunpack.c.h.b16 %v635
        %v769 = vunpack.c.l.b16 %v636
        %v770 = vunpack.c.h.b16 %v636
        %v771 = vunpack.c.l.b16 %v637
        %v772 = vunpack.c.h.b16 %v637
        %v773 = vunpack.c.l.b16 %v638
        %v774 = vunpack.c.h.b16 %v638
        %v775 = vpack.c.b16 %v713, %v711
        %v776 = vpack.c.b16 %v714, %v712
        %v777 = vpack.c.b16 %v717, %v715
        %v778 = vpack.c.b16 %v718, %v716
        %v779 = vpack.c.b16 %v721, %v719
        %v780 = vpack.c.b16 %v722, %v720
        %v781 = vpack.c.b16 %v725, %v723
        %v782 = vpack.c.b16 %v726, %v724
        %v783 = vpack.c.b16 %v729, %v727
        %v784 = vpack.c.b16 %v730, %v728
        %v785 = vpack.c.b16 %v733, %v731
        %v786 = vpack.c.b16 %v734, %v732
        %v787 = vpack.c.b16 %v737, %v735
        %v788 = vpack.c.b16 %v738, %v736
        %v789 = vpack.c.b16 %v741, %v739
        %v790 = vpack.c.b16 %v742, %v740
        %v791 = vpack.c.b16 %v745, %v743
        %v792 = vpack.c.b16 %v746, %v744
        %v793 = vpack.c.b16 %v749, %v747
        %v794 = vpack.c.b16 %v750, %v748
        %v795 = vpack.c.b16 %v753, %v751
        %v796 = vpack.c.b16 %v754, %v752
        %v797 = vpack.c.b16 %v757, %v755
        %v798 = vpack.c.b16 %v758, %v756
        %v799 = vpack.c.b16 %v761, %v759
        %v800 = vpack.c.b16 %v762, %v760
        %v801 = vpack.c.b16 %v765, %v763
        %v802 = vpack.c.b16 %v766, %v764
        %v803 = vpack.c.b16 %v769, %v767
        %v804 = vpack.c.b16 %v770, %v768
        %v805 = vpack.c.b16 %v773, %v771
        %v806 = vpack.c.b16 %v774, %v772
        %839 = vmatpush.bf16.msra.mxu0 %v789
        %840 = vmatpush.bf16.msra.mxu0 %v787
        %841 = vmatpush.bf16.msra.mxu0 %v785
        %842 = vmatpush.bf16.msra.mxu0 %v783
        %843 = vmatpush.bf16.msra.mxu0 %v781
        %844 = vmatpush.bf16.msra.mxu0 %v779
        %845 = vmatpush.bf16.msra.mxu0 %v777
        %846 = vmatpush.bf16.msra.mxu0 %v775
        %847 = vmatmul.bf16.gmra.mxu0 %v663
        %v848 = vpop.f32.mrf.mxu0
        %v849 = vadd.f32 0.0, %v848
        %v850 = vpop.f32.mrf.mxu0
        %v851 = vadd.f32 0.0, %v850
        %852 = vmatmul.bf16.gmra.mxu0 %v665
        %v853 = vpop.f32.mrf.mxu0
        %v854 = vadd.f32 0.0, %v853
        %v855 = vpop.f32.mrf.mxu0
        %v856 = vadd.f32 0.0, %v855
        %857 = vmatmul.bf16.gmra.mxu0 %v667
        %v858 = vpop.f32.mrf.mxu0
        %v859 = vadd.f32 0.0, %v858
        %v860 = vpop.f32.mrf.mxu0
        %v861 = vadd.f32 0.0, %v860
        %862 = vmatmul.bf16.gmra.mxu0 %v669
        %v863 = vpop.f32.mrf.mxu0
        %v864 = vadd.f32 0.0, %v863
        %v865 = vpop.f32.mrf.mxu0
        %v866 = vadd.f32 0.0, %v865
        %867 = vdwg.mxu0
        %868 = vmatpush.bf16.msra.mxu0 %v805
        %869 = vmatpush.bf16.msra.mxu0 %v803
        %870 = vmatpush.bf16.msra.mxu0 %v801
        %871 = vmatpush.bf16.msra.mxu0 %v799
        %872 = vmatpush.bf16.msra.mxu0 %v797
        %873 = vmatpush.bf16.msra.mxu0 %v795
        %874 = vmatpush.bf16.msra.mxu0 %v793
        %875 = vmatpush.bf16.msra.mxu0 %v791
        %876 = vmatmul.bf16.gmra.mxu0 %v664
        %v877 = vpop.f32.mrf.mxu0
        %v878 = vadd.f32 %v849, %v877
        %v879 = vpop.f32.mrf.mxu0
        %v880 = vadd.f32 %v851, %v879
        %881 = vmatmul.bf16.gmra.mxu0 %v666
        %v882 = vpop.f32.mrf.mxu0
        %v883 = vadd.f32 %v854, %v882
        %v884 = vpop.f32.mrf.mxu0
        %v885 = vadd.f32 %v856, %v884
        %886 = vmatmul.bf16.gmra.mxu0 %v668
        %v887 = vpop.f32.mrf.mxu0
        %v888 = vadd.f32 %v859, %v887
        %v889 = vpop.f32.mrf.mxu0
        %v890 = vadd.f32 %v861, %v889
        %891 = vmatmul.bf16.gmra.mxu0 %v670
        %v892 = vpop.f32.mrf.mxu0
        %v893 = vadd.f32 %v864, %v892
        %v894 = vpop.f32.mrf.mxu0
        %v895 = vadd.f32 %v866, %v894
        %896 = vdwg.mxu0
        %897 = vmatpush.bf16.msra.mxu0 %v790
        %898 = vmatpush.bf16.msra.mxu0 %v788
        %899 = vmatpush.bf16.msra.mxu0 %v786
        %900 = vmatpush.bf16.msra.mxu0 %v784
        %901 = vmatpush.bf16.msra.mxu0 %v782
        %902 = vmatpush.bf16.msra.mxu0 %v780
        %903 = vmatpush.bf16.msra.mxu0 %v778
        %904 = vmatpush.bf16.msra.mxu0 %v776
        %905 = vmatmul.bf16.gmra.mxu0 %v663
        %v906 = vpop.f32.mrf.mxu0
        %v907 = vadd.f32 0.0, %v906
        %v908 = vpop.f32.mrf.mxu0
        %v909 = vadd.f32 0.0, %v908
        %910 = vmatmul.bf16.gmra.mxu0 %v665
        %v911 = vpop.f32.mrf.mxu0
        %v912 = vadd.f32 0.0, %v911
        %v913 = vpop.f32.mrf.mxu0
        %v914 = vadd.f32 0.0, %v913
        %915 = vmatmul.bf16.gmra.mxu0 %v667
        %v916 = vpop.f32.mrf.mxu0
        %v917 = vadd.f32 0.0, %v916
        %v918 = vpop.f32.mrf.mxu0
        %v919 = vadd.f32 0.0, %v918
        %920 = vmatmul.bf16.gmra.mxu0 %v669
        %v921 = vpop.f32.mrf.mxu0
        %v922 = vadd.f32 0.0, %v921
        %v923 = vpop.f32.mrf.mxu0
        %v924 = vadd.f32 0.0, %v923
        %925 = vdwg.mxu0
        %926 = vmatpush.bf16.msra.mxu0 %v806
        %927 = vmatpush.bf16.msra.mxu0 %v804
        %928 = vmatpush.bf16.msra.mxu0 %v802
        %929 = vmatpush.bf16.msra.mxu0 %v800
        %930 = vmatpush.bf16.msra.mxu0 %v798
        %931 = vmatpush.bf16.msra.mxu0 %v796
        %932 = vmatpush.bf16.msra.mxu0 %v794
        %933 = vmatpush.bf16.msra.mxu0 %v792
        %934 = vmatmul.bf16.gmra.mxu0 %v664
        %v935 = vpop.f32.mrf.mxu0
        %v936 = vadd.f32 %v907, %v935
        %v937 = vpop.f32.mrf.mxu0
        %v938 = vadd.f32 %v909, %v937
        %939 = vmatmul.bf16.gmra.mxu0 %v666
        %v940 = vpop.f32.mrf.mxu0
        %v941 = vadd.f32 %v912, %v940
        %v942 = vpop.f32.mrf.mxu0
        %v943 = vadd.f32 %v914, %v942
        %944 = vmatmul.bf16.gmra.mxu0 %v668
        %v945 = vpop.f32.mrf.mxu0
        %v946 = vadd.f32 %v917, %v945
        %v947 = vpop.f32.mrf.mxu0
        %v948 = vadd.f32 %v919, %v947
        %949 = vmatmul.bf16.gmra.mxu0 %v670
        %v950 = vpop.f32.mrf.mxu0
        %v951 = vadd.f32 %v922, %v950
        %v952 = vpop.f32.mrf.mxu0
        %v953 = vadd.f32 %v924, %v952
        %954 = vdwg.mxu0
        %v955 = vld [vmem:[#allocation8] sm:$0xf]
        %v956 = vld [vmem:[#allocation8 + $0x4] sm:$0xf]
        %v957 = vld [vmem:[#allocation8 + $0x8] sm:$0xf]
        %v958 = vld [vmem:[#allocation8 + $0xc] sm:$0xf]
        %v959 = vld [vmem:[#allocation8 + $0x10] sm:$0xf]
        %v960 = vld [vmem:[#allocation8 + $0x14] sm:$0xf]
        %v961 = vld [vmem:[#allocation8 + $0x18] sm:$0xf]
        %v962 = vld [vmem:[#allocation8 + $0x1c] sm:$0xf]
        %v963 = vpack.c.bf16 %v880, %v878
        %v964 = vpack.c.bf16 %v938, %v936
        %v965 = vpack.c.bf16 %v885, %v883
        %v966 = vpack.c.bf16 %v943, %v941
        %v967 = vpack.c.bf16 %v890, %v888
        %v968 = vpack.c.bf16 %v948, %v946
        %v969 = vpack.c.bf16 %v895, %v893
        %v970 = vpack.c.bf16 %v953, %v951
        %v979 = vunpack.c.l.b16 %v955
        %v980 = vunpack.c.l.b16 %v956
        %v981 = vunpack.c.l.b16 %v957
        %v982 = vunpack.c.l.b16 %v958
        %v983 = vunpack.c.l.b16 %v959
        %v984 = vunpack.c.l.b16 %v960
        %v985 = vunpack.c.l.b16 %v961
        %v986 = vunpack.c.l.b16 %v962
        %v987 = vpack.c.b16 %v980, %v979
        %v988 = vpack.c.b16 %v982, %v981
        %v989 = vpack.c.b16 %v984, %v983
        %v990 = vpack.c.b16 %v986, %v985
        %vm991 = vcmask 523264
        %v993 = vsel %vm991, %v987, 0
        %v996 = vsel %vm991, %v988, 0
        %v999 = vsel %vm991, %v989, 0
        %v1002 = vsel %vm991, %v990, 0
        %1004 = vmatpush.bf16.msra.mxu0 0
        %1005 = vmatpush.bf16.msra.mxu0 0
        %1006 = vmatpush.bf16.msra.mxu0 0
        %1007 = vmatpush.bf16.msra.mxu0 0
        %1008 = vmatpush.bf16.msra.mxu0 %v969
        %1009 = vmatpush.bf16.msra.mxu0 %v967
        %1010 = vmatpush.bf16.msra.mxu0 %v965
        %1011 = vmatpush.bf16.msra.mxu0 %v963
        %1012 = vmatmul.bf16.gmra.mxu0 %v993
        %v1013 = vpop.f32.mrf.mxu0
        %v1014 = vadd.f32 0.0, %v1013
        %v1015 = vpop.f32.mrf.mxu0
        %v1016 = vadd.f32 0.0, %v1015
        %1017 = vmatmul.bf16.gmra.mxu0 %v996
        %v1018 = vpop.f32.mrf.mxu0
        %v1019 = vadd.f32 0.0, %v1018
        %v1020 = vpop.f32.mrf.mxu0
        %v1021 = vadd.f32 0.0, %v1020
        %1022 = vmatmul.bf16.gmra.mxu0 %v999
        %v1023 = vpop.f32.mrf.mxu0
        %v1024 = vadd.f32 0.0, %v1023
        %v1025 = vpop.f32.mrf.mxu0
        %v1026 = vadd.f32 0.0, %v1025
        %1027 = vmatmul.bf16.gmra.mxu0 %v1002
        %v1028 = vpop.f32.mrf.mxu0
        %v1029 = vadd.f32 0.0, %v1028
        %v1030 = vpop.f32.mrf.mxu0
        %v1031 = vadd.f32 0.0, %v1030
        %1032 = vdwg.mxu0
        %1033 = vmatpush.bf16.msra.mxu0 0
        %1034 = vmatpush.bf16.msra.mxu0 0
        %1035 = vmatpush.bf16.msra.mxu0 0
        %1036 = vmatpush.bf16.msra.mxu0 0
        %1037 = vmatpush.bf16.msra.mxu0 %v970
        %1038 = vmatpush.bf16.msra.mxu0 %v968
        %1039 = vmatpush.bf16.msra.mxu0 %v966
        %1040 = vmatpush.bf16.msra.mxu0 %v964
        %1041 = vmatmul.bf16.gmra.mxu0 %v993
        %v1042 = vpop.f32.mrf.mxu0
        %v1043 = vadd.f32 0.0, %v1042
        %v1044 = vpop.f32.mrf.mxu0
        %v1045 = vadd.f32 0.0, %v1044
        %1046 = vmatmul.bf16.gmra.mxu0 %v996
        %v1047 = vpop.f32.mrf.mxu0
        %v1048 = vadd.f32 0.0, %v1047
        %v1049 = vpop.f32.mrf.mxu0
        %v1050 = vadd.f32 0.0, %v1049
        %1051 = vmatmul.bf16.gmra.mxu0 %v999
        %v1052 = vpop.f32.mrf.mxu0
        %v1053 = vadd.f32 0.0, %v1052
        %v1054 = vpop.f32.mrf.mxu0
        %v1055 = vadd.f32 0.0, %v1054
        %1056 = vmatmul.bf16.gmra.mxu0 %v1002
        %v1057 = vpop.f32.mrf.mxu0
        %v1058 = vadd.f32 0.0, %v1057
        %v1059 = vpop.f32.mrf.mxu0
        %v1060 = vadd.f32 0.0, %v1059
        %1061 = vdwg.mxu0
        %v1062 = vld [vmem:[%s242] sm:$0xff]
        %v1063 = vld [vmem:[%s242 + $0x8] sm:$0xff]
        %v1064 = vld [vmem:[%s242 + $0x10] sm:$0xff]
        %v1065 = vld [vmem:[%s242 + $0x18] sm:$0xff]
        %v1066 = vmul.f32 %v1062, %v1014
        %v1067 = vmul.f32 %v1063, %v1043
        %v1068 = vmul.f32 %v1064, %v1016
        %v1069 = vmul.f32 %v1065, %v1045
        %v1070 = vadd.f32 %v1066, %v1067
        %v1071 = vadd.f32 %v1070, %v1068
        %v1072 = vadd.f32 %v1071, %v1069
        %1073 = vadd.xlane.f32.xlu0 %v1072
        %v1074 = vpop.xlane.xlu0 %1073
        %v1075 = vrot.slane %v1074, 4
        %v1076 = vadd.f32 %v1074, %v1075
        %v1077 = vrot.slane %v1076, 2
        %v1078 = vadd.f32 %v1076, %v1077
        %v1079 = vrot.slane %v1078, 1
        %v1080 = vadd.f32 %v1078, %v1079
        %s1081 = vtos %v1080
        %v1082 = vmul.f32 %v1062, %v1019
        %v1083 = vmul.f32 %v1063, %v1048
        %v1084 = vmul.f32 %v1064, %v1021
        %v1085 = vmul.f32 %v1065, %v1050
        %v1086 = vadd.f32 %v1082, %v1083
        %v1087 = vadd.f32 %v1086, %v1084
        %v1088 = vadd.f32 %v1087, %v1085
        %1089 = vadd.xlane.f32.xlu0 %v1088
        %v1090 = vpop.xlane.xlu0 %1089
        %v1091 = vrot.slane %v1090, 4
        %v1092 = vadd.f32 %v1090, %v1091
        %v1093 = vrot.slane %v1092, 2
        %v1094 = vadd.f32 %v1092, %v1093
        %v1095 = vrot.slane %v1094, 1
        %v1096 = vadd.f32 %v1094, %v1095
        %s1097 = vtos %v1096
        %s1098 = sadd.f32 %s1097, 1e-06
        %v1099 = vstv %s1098
        %v1100 = vrcp.pop %v1099
        %v1101 = vmul.f32 %v1099, %v1100
        %v1102 = vsub.f32 1.0, %v1101
        %v1103 = vmul.f32 %v1100, %v1102
        %v1104 = vadd.f32 %v1100, %v1103
        %vm1105 = vweird.f32 %v1099
        %vm1106 = vweird.f32 %v1100
        %vm1107 = vmor %vm1105, %vm1106
        %v1108 = vsel %vm1107, %v1100, %v1104
        %v1109 = vand.u32 2147483647, %v1099
        %vm1110 = vcmp.eq.f32.partialorder %v1109, 8.507059e+37
        %v1111 = vand.u32 %v1099, 2147483648
        %v1112 = vor.u32 1.1754944e-38, %v1111
        %v1113 = vsel %vm1110, %v1112, %v1108
        %s1114 = vtos %v1113
        %s1115 = smul.f32 %s1081, %s1114
        %v1116 = vld [vmem:[%s446] sm:$0xff]
        %v1117 = vld [vmem:[%s446 + $0x8] sm:$0xff]
        %v1118 = vld [vmem:[%s446 + $0x10] sm:$0xff]
        %v1119 = vld [vmem:[%s446 + $0x18] sm:$0xff]
        %v1120 = vmul.f32 %v1116, %v1024
        %v1121 = vmul.f32 %v1117, %v1053
        %v1122 = vmul.f32 %v1118, %v1026
        %v1123 = vmul.f32 %v1119, %v1055
        %v1124 = vadd.f32 %v1120, %v1121
        %v1125 = vadd.f32 %v1124, %v1122
        %v1126 = vadd.f32 %v1125, %v1123
        %1127 = vadd.xlane.f32.xlu0 %v1126
        %v1128 = vpop.xlane.xlu0 %1127
        %v1129 = vrot.slane %v1128, 4
        %v1130 = vadd.f32 %v1128, %v1129
        %v1131 = vrot.slane %v1130, 2
        %v1132 = vadd.f32 %v1130, %v1131
        %v1133 = vrot.slane %v1132, 1
        %v1134 = vadd.f32 %v1132, %v1133
        %s1135 = vtos %v1134
        %v1136 = vmul.f32 %v1116, %v1029
        %v1137 = vmul.f32 %v1117, %v1058
        %v1138 = vmul.f32 %v1118, %v1031
        %v1139 = vmul.f32 %v1119, %v1060
        %v1140 = vadd.f32 %v1136, %v1137
        %v1141 = vadd.f32 %v1140, %v1138
        %v1142 = vadd.f32 %v1141, %v1139
        %1143 = vadd.xlane.f32.xlu0 %v1142
        %v1144 = vpop.xlane.xlu0 %1143
        %v1145 = vrot.slane %v1144, 4
        %v1146 = vadd.f32 %v1144, %v1145
        %v1147 = vrot.slane %v1146, 2
        %v1148 = vadd.f32 %v1146, %v1147
        %v1149 = vrot.slane %v1148, 1
        %v1150 = vadd.f32 %v1148, %v1149
        %s1151 = vtos %v1150
        %s1152 = sadd.f32 %s1151, 1e-06
        %v1153 = vstv %s1152
        %v1154 = vrcp.pop %v1153
        %v1155 = vmul.f32 %v1153, %v1154
        %v1156 = vsub.f32 1.0, %v1155
        %v1157 = vmul.f32 %v1154, %v1156
        %v1158 = vadd.f32 %v1154, %v1157
        %vm1159 = vweird.f32 %v1153
        %vm1160 = vweird.f32 %v1154
        %vm1161 = vmor %vm1159, %vm1160
        %v1162 = vsel %vm1161, %v1154, %v1158
        %v1163 = vand.u32 2147483647, %v1153
        %vm1164 = vcmp.eq.f32.partialorder %v1163, 8.507059e+37
        %v1165 = vand.u32 %v1153, 2147483648
        %v1166 = vor.u32 1.1754944e-38, %v1165
        %v1167 = vsel %vm1164, %v1166, %v1162
        %s1168 = vtos %v1167
        %s1169 = smul.f32 %s1135, %s1168
        %v1170 = vstv %s1115
        %v1171 = vstv %s1169
        %v1172 = vlaneseq
        %vm1173 = vcmp.ge.s32.totalorder %v1172, 0
        %vm1174 = vcmp.lt.s32.totalorder %v1172, 1
        %vm1175 = vmand %vm1173, %vm1174
        %v1176 = vsel %vm1175, %v1170, %v1171
        %vm1177 = vcmask 8192
        %1178 = vst.msk [vmem:[%s291] sm:$0x1] %vm1177, %v1176
        %s1179 = sand.u32 %s127, 1
        %s1180 = scalar_lea.sflag [#allocation5], %s1179
        %s1181 = sand.u32 %s127, 1
        %s1182 = scalar_lea.vmem [#allocation11], %s1181
        // Predicated region
        $region53: #{tpu_custom_call.1} parent=35 // pred_check
          %p1183 = pneg %p137
        $region54: #{tpu_custom_call.1} parent=35 // pred_check_branch
          %1185 = sbr.rel (%p1183) target = $region56
        $region55: #{tpu_custom_call.1} parent=35 // pred_region
          %1187 = vsyncadd %s1180, 0
          %s1188 = scalar_lea.hbm %s4, %s25
          %s1190 = sshll.u32 %s1182, 4
          %s1191 = int_to_ptr.vmem [resolvable:$true] %s1190
          %s1192 = sshll.u32 %s1188, 4
          %s1193 = int_to_ptr.hbm [resolvable:$true] %s1192
          %1195 = dma.vmem_to_hbm [thread:$0]  %s1191, 16, %s1193, %s1180
        $region56: #{tpu_custom_call.1} parent=35 // pred_fallthru
          _
      $region36: #{tpu_custom_call.1} parent=5 // pred_fallthru
        _
      %p1196 = scmp.le.s32.totalorder 2, %s20
      // Predicated region
      $region57: #{tpu_custom_call.1} parent=5 // pred_check
        %p1197 = pneg %p1196
      $region58: #{tpu_custom_call.1} parent=5 // pred_check_branch
        %1199 = sbr.rel (%p1197) target = $region60
      $region59: #{tpu_custom_call.1} parent=5 // pred_region
        %s1200 = ssub.s32 %s20, 2
        // Predicated region
        $region61: #{tpu_custom_call.1} parent=59 // pred_check
          %p1201 = pneg %p143
        $region62: #{tpu_custom_call.1} parent=59 // pred_check_branch
          %1203 = sbr.rel (%p1201) target = $region64
        $region63: #{tpu_custom_call.1} parent=59 // pred_region
          %s1204 = sand.u32 %s128, 1
          %s1205 = scalar_lea.sflag [#allocation5], %s1204
          %s1206 = sand.u32 %s128, 1
          %s1207 = scalar_lea.vmem [#allocation11], %s1206
          %1209 = dma.done %s1205, 16
        $region64: #{tpu_custom_call.1} parent=59 // pred_fallthru
          _
      $region60: #{tpu_custom_call.1} parent=5 // pred_fallthru
        _
    $region6: #{tpu_custom_call.1} parent=1 // loop_footer
      %s24 = sadd.s32 1, %s20
    $region7: #{tpu_custom_call.1} parent=1 // loop_footer_branch
      %19 = sbr.rel target = $region3
    $region8: #{tpu_custom_call.1} parent=1 // loop_exit
      _
    %1210 = vsyncpa [#allocation4], 1
    %s1211 = scalar_lea.sflag [#allocation4], 1
    %1212 = vsyncpa %s1211, 1
    %1213 = vsyncpa [#allocation7], 1
    %s1214 = scalar_lea.sflag [#allocation7], 1
    %1215 = vsyncpa %s1214, 1
    %1216 = vsyncpa [#allocation10], 1
    %1217 = vsyncpa [#allocation5], 1
    %s1218 = scalar_lea.sflag [#allocation5], 1
    %1219 = vsyncpa %s1218, 1

</llo_original>
